<compile_context>
chip_gen: v5e
topology: v5e:2x2
jax: 0.10.0
libtpu: 0.0.40
codegen_flags: <defaults>
</compile_context>

<pallas_src>
import jax
import jax.numpy as jnp
from jax.experimental import pallas as pl
from jax.experimental.pallas import tpu as pltpu

HIDDEN = 500          # logical hidden width (matches the PyTorch module)
HIDDEN_PAD = 512      # padded to a multiple of 128 lanes


def _round_up(x, m):
    return ((x + m - 1) // m) * m


def _choose_row_tile(B):
    """Rows per grid step: big for throughput, >=2 steps for v7x megacore."""
    if B >= 1024:
        return 512
    if B >= 512:
        return 256
    if B >= 16:
        # ~half the batch, rounded up to a sublane multiple -> 2 grid steps.
        return _round_up(-(-B // 2), 8)
    # Tiny batch: single full-extent block (block dim == array dim is legal).
    return B


# ---------------------------------------------------------------------------
# Kernel: one row-tile of the whole 3-layer MLP. Weights live fully in VMEM.
# ---------------------------------------------------------------------------
def mlp_kernel(x_ref, w1_ref, b1_ref, w2_ref, b2_ref, w3_ref, b3_ref, o_ref):
    # Layer 1: Linear(in_pad, 512) + ReLU   (bf16 inputs, f32 accumulate)
    h = jnp.dot(x_ref[...], w1_ref[...], preferred_element_type=jnp.float32)
    h = jnp.maximum(h + b1_ref[...], 0.0)
    # Layer 2: Linear(512, 512) + ReLU
    h = jnp.dot(h.astype(w2_ref.dtype), w2_ref[...],
                preferred_element_type=jnp.float32)
    h = jnp.maximum(h + b2_ref[...], 0.0)
    # Layer 3: Linear(512, 512) + ReLU
    h = jnp.dot(h.astype(w3_ref.dtype), w3_ref[...],
                preferred_element_type=jnp.float32)
    h = jnp.maximum(h + b3_ref[...], 0.0)
    o_ref[...] = h.astype(o_ref.dtype)


# ---------------------------------------------------------------------------
# Wrapper
# ---------------------------------------------------------------------------
def mlp_forward(x, kernel_params):
    """x: (B, seq, dim) float32.  kernel_params: padded bf16 weights / f32 biases.

    Returns (B, 500) float32.
    """
    w1, b1, w2, b2, w3, b3 = kernel_params
    B = x.shape[0]
    x_flat = x.reshape(B, -1)                 # nn.Flatten (row-major)
    K = x_flat.shape[1]
    K_pad = w1.shape[0]                       # padded in_features

    # Cast to bf16; pad the feature axis only if needed (exact: the matching
    # padded weight rows are zero).  No row padding -- ragged last grid block.
    xb = x_flat.astype(jnp.bfloat16)
    if K_pad != K:
        xb = jnp.pad(xb, ((0, 0), (0, K_pad - K)))

    row_tile = _choose_row_tile(B)
    grid = (pl.cdiv(B, row_tile),)

    # Grid-resident weights/biases: constant index_map + single buffer.
    resident = dict(pipeline_mode=pl.Buffered(1))

    out = pl.pallas_call(
        mlp_kernel,
        out_shape=jax.ShapeDtypeStruct((B, HIDDEN_PAD), jnp.float32),
        grid_spec=pltpu.PrefetchScalarGridSpec(
            num_scalar_prefetch=0,
            grid=grid,
            in_specs=[
                pl.BlockSpec((row_tile, K_pad), lambda i: (i, 0)),        # x tile
                pl.BlockSpec((K_pad, HIDDEN_PAD), lambda i: (0, 0), **resident),        # w1
                pl.BlockSpec((1, HIDDEN_PAD), lambda i: (0, 0), **resident),            # b1
                pl.BlockSpec((HIDDEN_PAD, HIDDEN_PAD), lambda i: (0, 0), **resident),   # w2
                pl.BlockSpec((1, HIDDEN_PAD), lambda i: (0, 0), **resident),            # b2
                pl.BlockSpec((HIDDEN_PAD, HIDDEN_PAD), lambda i: (0, 0), **resident),   # w3
                pl.BlockSpec((1, HIDDEN_PAD), lambda i: (0, 0), **resident),            # b3
            ],
            out_specs=pl.BlockSpec((row_tile, HIDDEN_PAD), lambda i: (i, 0)),
        ),
        compiler_params=pltpu.CompilerParams(
            dimension_semantics=("parallel",)),   # shards rows across TCs on v7x
    )(xb, w1, b1, w2, b2, w3, b3)

    return out[:, :HIDDEN]


# ---------------------------------------------------------------------------
# Parameter init (torch.nn.Linear-style) + padding / bf16 quantization
# ---------------------------------------------------------------------------
def init_params(key, in_features):
    """f32 params at their logical shapes, stored as (in, out) so y = x @ W + b."""

    def linear(key, fan_in, fan_out):
        kw, kb = jax.random.split(key)
        bound = 1.0 / (fan_in ** 0.5)
        w = jax.random.uniform(kw, (fan_in, fan_out), jnp.float32, -bound, bound)
        b = jax.random.uniform(kb, (1, fan_out), jnp.float32, -bound, bound)
        return w, b

    k1, k2, k3 = jax.random.split(key, 3)
    w1, b1 = linear(k1, in_features, HIDDEN)
    w2, b2 = linear(k2, HIDDEN, HIDDEN)
    w3, b3 = linear(k3, HIDDEN, HIDDEN)
    return w1, b1, w2, b2, w3, b3


def prepare_kernel_params(params_f32):
    """Zero-pad to lane-aligned shapes; weights -> bf16, biases stay f32."""
    w1, b1, w2, b2, w3, b3 = params_f32
    in_f = w1.shape[0]
    in_pad = _round_up(in_f, 128)

    def pad_w(w, rows, cols):
        wp = jnp.zeros((rows, cols), jnp.float32)
        wp = wp.at[:w.shape[0], :w.shape[1]].set(w)
        return wp.astype(jnp.bfloat16)

    def pad_b(b, cols):
        bp = jnp.zeros((1, cols), jnp.float32)
        return bp.at[:, :b.shape[1]].set(b)

    return (pad_w(w1, in_pad, HIDDEN_PAD), pad_b(b1, HIDDEN_PAD),
            pad_w(w2, HIDDEN_PAD, HIDDEN_PAD), pad_b(b2, HIDDEN_PAD),
            pad_w(w3, HIDDEN_PAD, HIDDEN_PAD), pad_b(b3, HIDDEN_PAD))


# ---------------------------------------------------------------------------
# References
# ---------------------------------------------------------------------------
def reference_forward_f32(x, params_f32):
    """Pure-JAX f32 reference of the original module (eval mode)."""
    w1, b1, w2, b2, w3, b3 = params_f32
    h = x.reshape(x.shape[0], -1)
    h = jnp.maximum(h @ w1 + b1, 0.0)
    h = jnp.maximum(h @ w2 + b2, 0.0)
    h = jnp.maximum(h @ w3 + b3, 0.0)
    return h


def reference_forward_bf16(x, kernel_params):
    """Pure-JAX reference using the same padded bf16 params / f32 accumulation."""
    w1, b1, w2, b2, w3, b3 = kernel_params
    B = x.shape[0]
    xf = x.reshape(B, -1).astype(jnp.bfloat16)
    K = xf.shape[1]
    if w1.shape[0] != K:
        xf = jnp.pad(xf, ((0, 0), (0, w1.shape[0] - K)))
    h = jnp.maximum(
        jnp.dot(xf, w1, preferred_element_type=jnp.float32) + b1, 0.0)
    h = jnp.maximum(
        jnp.dot(h.astype(jnp.bfloat16), w2, preferred_element_type=jnp.float32) + b2, 0.0)
    h = jnp.maximum(
        jnp.dot(h.astype(jnp.bfloat16), w3, preferred_element_type=jnp.float32) + b3, 0.0)
    return h[:, :HIDDEN]


if __name__ == "__main__":
    batch, sequence_len, dimension_num = 2, 8, 32
    key = jax.random.PRNGKey(0)
    kx, kp = jax.random.split(key)

    x = jax.random.normal(kx, (batch, sequence_len, dimension_num), jnp.float32)
    params_f32 = init_params(kp, sequence_len * dimension_num)
    kernel_params = prepare_kernel_params(params_f32)

    out = mlp_forward(x, kernel_params)
    out = jax.block_until_ready(out)
    assert out.shape == (batch, HIDDEN)

    # Tight check vs. an identical bf16/f32-accumulate JAX reference.
    ref_bf16 = reference_forward_bf16(x, kernel_params)
    assert jnp.allclose(out, ref_bf16, atol=1e-3, rtol=1e-3), \
        "mismatch vs bf16 reference"

    # Loose check vs. the full-f32 reference (bf16 weights change numerics).
    ref_f32 = reference_forward_f32(x, params_f32)
    assert jnp.allclose(out, ref_f32, atol=5e-2, rtol=5e-2), \
        "mismatch vs f32 reference"

    print("KERNEL_OK")
</pallas_src>

<mosaic_0001>
module attributes {stable_mosaic.version = 11 : i64} {
  func.func @mlp_kernel(%arg0: i32, %arg1: memref<2x256xbf16, #tpu.memory_space<vmem>>, %arg2: memref<256x512xbf16, #tpu.memory_space<vmem>>, %arg3: memref<1x512xf32, #tpu.memory_space<vmem>>, %arg4: memref<512x512xbf16, #tpu.memory_space<vmem>>, %arg5: memref<1x512xf32, #tpu.memory_space<vmem>>, %arg6: memref<512x512xbf16, #tpu.memory_space<vmem>>, %arg7: memref<1x512xf32, #tpu.memory_space<vmem>>, %arg8: memref<2x512xf32, #tpu.memory_space<vmem>>) attributes {dimension_semantics = [#tpu.dimension_semantics<parallel>], iteration_bounds = array<i64: 1>, scalar_prefetch = 0 : i64, scratch_operands = 0 : i64, tpu.core_type = #tpu.core_type<tc>, window_params = [{transform_indices = @transform_0, window_bounds = array<i64: 2, 256>}, {pipeline_mode = #tpu.pipeline_mode<synchronous>, transform_indices = @transform_1, window_bounds = array<i64: 256, 512>}, {pipeline_mode = #tpu.pipeline_mode<synchronous>, transform_indices = @transform_2, window_bounds = array<i64: 1, 512>}, {pipeline_mode = #tpu.pipeline_mode<synchronous>, transform_indices = @transform_3, window_bounds = array<i64: 512, 512>}, {pipeline_mode = #tpu.pipeline_mode<synchronous>, transform_indices = @transform_4, window_bounds = array<i64: 1, 512>}, {pipeline_mode = #tpu.pipeline_mode<synchronous>, transform_indices = @transform_5, window_bounds = array<i64: 512, 512>}, {pipeline_mode = #tpu.pipeline_mode<synchronous>, transform_indices = @transform_6, window_bounds = array<i64: 1, 512>}, {transform_indices = @transform_7, window_bounds = array<i64: 2, 512>}]} {
    %c0 = arith.constant 0 : index
    %c0_0 = arith.constant 0 : index
    %0 = vector.load %arg1[%c0, %c0_0] : memref<2x256xbf16, #tpu.memory_space<vmem>>, vector<2x256xbf16>
    %c0_1 = arith.constant 0 : index
    %c0_2 = arith.constant 0 : index
    %1 = vector.load %arg2[%c0_1, %c0_2] : memref<256x512xbf16, #tpu.memory_space<vmem>>, vector<256x512xbf16>
    %cst = arith.constant dense<0.000000e+00> : vector<2x512xf32>
    %2 = tpu.matmul %0, %1, %cst {dimension_numbers = #tpu.dot_dimension_numbers<[1], [0], [0], [1], [0, 0, 1, 1], [], []>} : vector<2x256xbf16>, vector<256x512xbf16>, vector<2x512xf32> -> vector<2x512xf32>
    %c0_3 = arith.constant 0 : index
    %c0_4 = arith.constant 0 : index
    %3 = vector.load %arg3[%c0_3, %c0_4] : memref<1x512xf32, #tpu.memory_space<vmem>>, vector<1x512xf32>
    %4 = vector.broadcast %3 : vector<1x512xf32> to vector<2x512xf32>
    %5 = arith.addf %2, %4 : vector<2x512xf32>
    %cst_5 = arith.constant 0.000000e+00 : f32
    %6 = vector.broadcast %cst_5 : f32 to vector<2x512xf32>
    %7 = arith.maximumf %5, %6 : vector<2x512xf32>
    %8 = arith.truncf %7 : vector<2x512xf32> to vector<2x512xbf16>
    %c0_6 = arith.constant 0 : index
    %c0_7 = arith.constant 0 : index
    %9 = vector.load %arg4[%c0_6, %c0_7] : memref<512x512xbf16, #tpu.memory_space<vmem>>, vector<512x512xbf16>
    %cst_8 = arith.constant dense<0.000000e+00> : vector<2x512xf32>
    %10 = tpu.matmul %8, %9, %cst_8 {dimension_numbers = #tpu.dot_dimension_numbers<[1], [0], [0], [1], [0, 0, 1, 1], [], []>} : vector<2x512xbf16>, vector<512x512xbf16>, vector<2x512xf32> -> vector<2x512xf32>
    %c0_9 = arith.constant 0 : index
    %c0_10 = arith.constant 0 : index
    %11 = vector.load %arg5[%c0_9, %c0_10] : memref<1x512xf32, #tpu.memory_space<vmem>>, vector<1x512xf32>
    %12 = vector.broadcast %11 : vector<1x512xf32> to vector<2x512xf32>
    %13 = arith.addf %10, %12 : vector<2x512xf32>
    %cst_11 = arith.constant 0.000000e+00 : f32
    %14 = vector.broadcast %cst_11 : f32 to vector<2x512xf32>
    %15 = arith.maximumf %13, %14 : vector<2x512xf32>
    %16 = arith.truncf %15 : vector<2x512xf32> to vector<2x512xbf16>
    %c0_12 = arith.constant 0 : index
    %c0_13 = arith.constant 0 : index
    %17 = vector.load %arg6[%c0_12, %c0_13] : memref<512x512xbf16, #tpu.memory_space<vmem>>, vector<512x512xbf16>
    %cst_14 = arith.constant dense<0.000000e+00> : vector<2x512xf32>
    %18 = tpu.matmul %16, %17, %cst_14 {dimension_numbers = #tpu.dot_dimension_numbers<[1], [0], [0], [1], [0, 0, 1, 1], [], []>} : vector<2x512xbf16>, vector<512x512xbf16>, vector<2x512xf32> -> vector<2x512xf32>
    %c0_15 = arith.constant 0 : index
    %c0_16 = arith.constant 0 : index
    %19 = vector.load %arg7[%c0_15, %c0_16] : memref<1x512xf32, #tpu.memory_space<vmem>>, vector<1x512xf32>
    %20 = vector.broadcast %19 : vector<1x512xf32> to vector<2x512xf32>
    %21 = arith.addf %18, %20 : vector<2x512xf32>
    %cst_17 = arith.constant 0.000000e+00 : f32
    %22 = vector.broadcast %cst_17 : f32 to vector<2x512xf32>
    %23 = arith.maximumf %21, %22 : vector<2x512xf32>
    %c0_18 = arith.constant 0 : index
    %c0_19 = arith.constant 0 : index
    %24 = vector.load %arg8[%c0_18, %c0_19] : memref<2x512xf32, #tpu.memory_space<vmem>>, vector<2x512xf32>
    tpu.vector_store %arg8[%c0_18, %c0_19], %23 {strides = array<i32>} : memref<2x512xf32, #tpu.memory_space<vmem>>, vector<2x512xf32>,
    return
  }
  func.func @transform_0(%arg0: i32) -> (i32, i32) {
    %c0_i32 = arith.constant 0 : i32
    %c0_i32_0 = arith.constant 0 : i32
    return %arg0, %c0_i32 : i32, i32
  }
  func.func @transform_1(%arg0: i32) -> (i32, i32) {
    %c0_i32 = arith.constant 0 : i32
    %c0_i32_0 = arith.constant 0 : i32
    %c0_i32_1 = arith.constant 0 : i32
    return %c0_i32, %c0_i32_0 : i32, i32
  }
  func.func @transform_2(%arg0: i32) -> (i32, i32) {
    %c0_i32 = arith.constant 0 : i32
    %c0_i32_0 = arith.constant 0 : i32
    %c0_i32_1 = arith.constant 0 : i32
    return %c0_i32, %c0_i32_0 : i32, i32
  }
  func.func @transform_3(%arg0: i32) -> (i32, i32) {
    %c0_i32 = arith.constant 0 : i32
    %c0_i32_0 = arith.constant 0 : i32
    %c0_i32_1 = arith.constant 0 : i32
    return %c0_i32, %c0_i32_0 : i32, i32
  }
  func.func @transform_4(%arg0: i32) -> (i32, i32) {
    %c0_i32 = arith.constant 0 : i32
    %c0_i32_0 = arith.constant 0 : i32
    %c0_i32_1 = arith.constant 0 : i32
    return %c0_i32, %c0_i32_0 : i32, i32
  }
  func.func @transform_5(%arg0: i32) -> (i32, i32) {
    %c0_i32 = arith.constant 0 : i32
    %c0_i32_0 = arith.constant 0 : i32
    %c0_i32_1 = arith.constant 0 : i32
    return %c0_i32, %c0_i32_0 : i32, i32
  }
  func.func @transform_6(%arg0: i32) -> (i32, i32) {
    %c0_i32 = arith.constant 0 : i32
    %c0_i32_0 = arith.constant 0 : i32
    %c0_i32_1 = arith.constant 0 : i32
    return %c0_i32, %c0_i32_0 : i32, i32
  }
  func.func @transform_7(%arg0: i32) -> (i32, i32) {
    %c0_i32 = arith.constant 0 : i32
    %c0_i32_0 = arith.constant 0 : i32
    return %arg0, %c0_i32 : i32, i32
  }
}

</mosaic_0001>

<llo_original>
// kernel: tpu_custom_call.1
$region0: #{tpu_custom_call.1}
  #allocation0 [shape = 'u32[]', space=smem, size = 0x4, offset = 0x4, fixed_abs, tag = 'smem constant byte address 0x4 - core index']
  #allocation1 [shape = 'u32[72,128]{1,0:T(1,128)}', space=vmem, size = 0x9000, scoped, tag = 'internal scratch']
  %s0 = inlined_call_operand.hbm [shape: bf16[2,256], index: 0, kind: input, shape index: {}]
  %s1 = inlined_call_operand.hbm [shape: bf16[256,512], index: 1, kind: input, shape index: {}]
  %s2 = inlined_call_operand.hbm [shape: f32[1,512], index: 2, kind: input, shape index: {}]
  %s3 = inlined_call_operand.hbm [shape: bf16[512,512], index: 3, kind: input, shape index: {}]
  %s4 = inlined_call_operand.hbm [shape: f32[1,512], index: 4, kind: input, shape index: {}]
  %s5 = inlined_call_operand.hbm [shape: bf16[512,512], index: 5, kind: input, shape index: {}]
  %s6 = inlined_call_operand.vmem [shape: f32[1,512], index: 6, kind: input, shape index: {}]
  %s7 = inlined_call_operand.hbm [shape: f32[2,512], index: 7, kind: output, shape index: {}]
  %s8 = sld [smem:[#allocation0]]
  $region62: #{tpu_custom_call.1} parent=0
    _
  %s10 = ssub.s32 1, %s8
  %s11 = scalar_select 0, %s10, %s8
  $region1: #{tpu_custom_call.1} parent=0
    #allocation2 [shape = 'u8[1024]{0}', space=vmem, size = 0x400, scoped, tag = 'input window, operand 0, single buffered']
    #allocation3 [shape = 's32[1]{0}', space=sflag, size = 0x4, scoped, tag = 'scoped memory for tpu_custom_call.1']
    #allocation4 [shape = 's32[1]{0}', space=sflag, size = 0x4, scoped, tag = 'scoped memory for tpu_custom_call.1']
    #allocation5 [shape = 'u8[262144]{0}', space=vmem, size = 0x40000, scoped, tag = 'input window, operand 1, single buffered']
    #allocation6 [shape = 's32[1]{0}', space=sflag, size = 0x4, scoped, tag = 'scoped memory for tpu_custom_call.1']
    #allocation7 [shape = 'u8[2048]{0}', space=vmem, size = 0x800, scoped, tag = 'input window, operand 2, single buffered']
    #allocation8 [shape = 'u8[524288]{0}', space=vmem, size = 0x80000, scoped, tag = 'input window, operand 3, single buffered']
    #allocation9 [shape = 's32[1]{0}', space=sflag, size = 0x4, scoped, tag = 'scoped memory for tpu_custom_call.1']
    #allocation10 [shape = 'u8[2048]{0}', space=vmem, size = 0x800, scoped, tag = 'input window, operand 4, single buffered']
    #allocation11 [shape = 'u8[524288]{0}', space=vmem, size = 0x80000, scoped, tag = 'input window, operand 5, single buffered']
    #allocation12 [shape = 's32[1]{0}', space=sflag, size = 0x4, scoped, tag = 'scoped memory for tpu_custom_call.1']
    #allocation13 [shape = 'u8[4096]{0}', space=vmem, size = 0x1000, scoped, tag = 'output window, operand 0, single buffered']
    %12 = vsyncpa [#allocation3], 0
    %13 = vsyncpa [#allocation6], 0
    %14 = vsyncpa [#allocation9], 0
    %15 = vsyncpa [#allocation12], 0
    %16 = vsyncpa [#allocation4], 0
    // Predicated region
    $region2: #{tpu_custom_call.1} parent=1 // pred_check
      _
    $region3: #{tpu_custom_call.1} parent=1 // pred_check_branch
      %18 = sbr.rel (0) target = $region5
    $region4: #{tpu_custom_call.1} parent=1 // pred_region
      %20 = vsyncadd [#allocation3], 0
      %s22 = sshll.u32 %s0, 4
      %s23 = int_to_ptr.hbm [resolvable:$true] %s22
      %s24 = sshll.u32 [#allocation2], 4
      %s25 = int_to_ptr.vmem [resolvable:$true] %s24
      %27 = dma.hbm_to_vmem [thread:$0]  %s23, 32, %s25, [#allocation3]
    $region5: #{tpu_custom_call.1} parent=1 // pred_fallthru
      _
    // Predicated region
    $region6: #{tpu_custom_call.1} parent=1 // pred_check
      _
    $region7: #{tpu_custom_call.1} parent=1 // pred_check_branch
      %29 = sbr.rel (0) target = $region9
    $region8: #{tpu_custom_call.1} parent=1 // pred_region
      %31 = vsyncadd [#allocation6], 0
      %s32 = sshll.u32 %s1, 4
      %s33 = int_to_ptr.hbm [resolvable:$true] %s32
      %s34 = sshll.u32 [#allocation5], 4
      %s35 = int_to_ptr.vmem [resolvable:$true] %s34
      %40 = dma.hbm_to_vmem [thread:$0]  %s33, 8192, %s35, [#allocation6], 256, 256, 16
    $region9: #{tpu_custom_call.1} parent=1 // pred_fallthru
      _
    // Predicated region
    $region10: #{tpu_custom_call.1} parent=1 // pred_check
      _
    $region11: #{tpu_custom_call.1} parent=1 // pred_check_branch
      %42 = sbr.rel (0) target = $region13
    $region12: #{tpu_custom_call.1} parent=1 // pred_region
      %44 = vsyncadd [#allocation6], 0
      %s46 = sshll.u32 %s2, 4
      %s47 = int_to_ptr.hbm [resolvable:$true] %s46
      %s48 = sshll.u32 [#allocation7], 4
      %s49 = int_to_ptr.vmem [resolvable:$true] %s48
      %51 = dma.hbm_to_vmem [thread:$0]  %s47, 64, %s49, [#allocation6]
    $region13: #{tpu_custom_call.1} parent=1 // pred_fallthru
      _
    // Predicated region
    $region14: #{tpu_custom_call.1} parent=1 // pred_check
      _
    $region15: #{tpu_custom_call.1} parent=1 // pred_check_branch
      %53 = sbr.rel (0) target = $region17
    $region16: #{tpu_custom_call.1} parent=1 // pred_region
      %55 = vsyncadd [#allocation9], 0
      %s56 = sshll.u32 %s3, 4
      %s57 = int_to_ptr.hbm [resolvable:$true] %s56
      %s58 = sshll.u32 [#allocation8], 4
      %s59 = int_to_ptr.vmem [resolvable:$true] %s58
      %64 = dma.hbm_to_vmem [thread:$0]  %s57, 16384, %s59, [#allocation9], 256, 256, 16
    $region17: #{tpu_custom_call.1} parent=1 // pred_fallthru
      _
    // Predicated region
    $region18: #{tpu_custom_call.1} parent=1 // pred_check
      _
    $region19: #{tpu_custom_call.1} parent=1 // pred_check_branch
      %66 = sbr.rel (0) target = $region21
    $region20: #{tpu_custom_call.1} parent=1 // pred_region
      %68 = vsyncadd [#allocation9], 0
      %s70 = sshll.u32 %s4, 4
      %s71 = int_to_ptr.hbm [resolvable:$true] %s70
      %s72 = sshll.u32 [#allocation10], 4
      %s73 = int_to_ptr.vmem [resolvable:$true] %s72
      %75 = dma.hbm_to_vmem [thread:$0]  %s71, 64, %s73, [#allocation9]
    $region21: #{tpu_custom_call.1} parent=1 // pred_fallthru
      _
    // Predicated region
    $region22: #{tpu_custom_call.1} parent=1 // pred_check
      _
    $region23: #{tpu_custom_call.1} parent=1 // pred_check_branch
      %77 = sbr.rel (0) target = $region25
    $region24: #{tpu_custom_call.1} parent=1 // pred_region
      %79 = vsyncadd [#allocation12], 0
      %s80 = sshll.u32 %s5, 4
      %s81 = int_to_ptr.hbm [resolvable:$true] %s80
      %s82 = sshll.u32 [#allocation11], 4
      %s83 = int_to_ptr.vmem [resolvable:$true] %s82
      %88 = dma.hbm_to_vmem [thread:$0]  %s81, 16384, %s83, [#allocation12], 256, 256, 16
    $region25: #{tpu_custom_call.1} parent=1 // pred_fallthru
      _
    // Predicated region
    $region26: #{tpu_custom_call.1} parent=1 // pred_check
      _
    $region27: #{tpu_custom_call.1} parent=1 // pred_check_branch
      %90 = sbr.rel (0) target = $region29
    $region28: #{tpu_custom_call.1} parent=1 // pred_region
      _
    $region29: #{tpu_custom_call.1} parent=1 // pred_fallthru
      _
    // Predicated region
    $region30: #{tpu_custom_call.1} parent=1 // pred_check
      _
    $region31: #{tpu_custom_call.1} parent=1 // pred_check_branch
      %92 = sbr.rel (0) target = $region33
    $region32: #{tpu_custom_call.1} parent=1 // pred_region
      %94 = dma.done [#allocation3], 32
    $region33: #{tpu_custom_call.1} parent=1 // pred_fallthru
      _
    // Predicated region
    $region34: #{tpu_custom_call.1} parent=1 // pred_check
      _
    $region35: #{tpu_custom_call.1} parent=1 // pred_check_branch
      %96 = sbr.rel (0) target = $region37
    $region36: #{tpu_custom_call.1} parent=1 // pred_region
      %98 = dma.done [#allocation6], 8192
    $region37: #{tpu_custom_call.1} parent=1 // pred_fallthru
      _
    // Predicated region
    $region38: #{tpu_custom_call.1} parent=1 // pred_check
      _
    $region39: #{tpu_custom_call.1} parent=1 // pred_check_branch
      %100 = sbr.rel (0) target = $region41
    $region40: #{tpu_custom_call.1} parent=1 // pred_region
      %102 = dma.done [#allocation6], 64
    $region41: #{tpu_custom_call.1} parent=1 // pred_fallthru
      _
    // Predicated region
    $region42: #{tpu_custom_call.1} parent=1 // pred_check
      _
    $region43: #{tpu_custom_call.1} parent=1 // pred_check_branch
      %104 = sbr.rel (0) target = $region45
    $region44: #{tpu_custom_call.1} parent=1 // pred_region
      %106 = dma.done [#allocation9], 16384
    $region45: #{tpu_custom_call.1} parent=1 // pred_fallthru
      _
    // Predicated region
    $region46: #{tpu_custom_call.1} parent=1 // pred_check
      _
    $region47: #{tpu_custom_call.1} parent=1 // pred_check_branch
      %108 = sbr.rel (0) target = $region49
    $region48: #{tpu_custom_call.1} parent=1 // pred_region
      %110 = dma.done [#allocation9], 64
    $region49: #{tpu_custom_call.1} parent=1 // pred_fallthru
      _
    // Predicated region
    $region50: #{tpu_custom_call.1} parent=1 // pred_check
      _
    $region51: #{tpu_custom_call.1} parent=1 // pred_check_branch
      %112 = sbr.rel (0) target = $region53
    $region52: #{tpu_custom_call.1} parent=1 // pred_region
      %114 = dma.done [#allocation12], 16384
    $region53: #{tpu_custom_call.1} parent=1 // pred_fallthru
      _
    %v115 = vld [vmem:[#allocation2] sm:$0x3]
    %v116 = vld [vmem:[#allocation5] sm:$0xff]
    %v117 = vld [vmem:[#allocation5 + $0x8] sm:$0xff]
    %v118 = vld [vmem:[#allocation5 + $0x10] sm:$0xff]
    %v119 = vld [vmem:[#allocation5 + $0x18] sm:$0xff]
    %v120 = vld [vmem:[#allocation5 + $0x20] sm:$0xff]
    %v121 = vld [vmem:[#allocation5 + $0x28] sm:$0xff]
    %v122 = vld [vmem:[#allocation5 + $0x30] sm:$0xff]
    %v123 = vld [vmem:[#allocation5 + $0x38] sm:$0xff]
    %v124 = vld [vmem:[#allocation5 + $0x40] sm:$0xff]
    %v125 = vld [vmem:[#allocation5 + $0x48] sm:$0xff]
    %v126 = vld [vmem:[#allocation5 + $0x50] sm:$0xff]
    %v127 = vld [vmem:[#allocation5 + $0x58] sm:$0xff]
    %v128 = vld [vmem:[#allocation5 + $0x60] sm:$0xff]
    %v129 = vld [vmem:[#allocation5 + $0x68] sm:$0xff]
    %v130 = vld [vmem:[#allocation5 + $0x70] sm:$0xff]
    %v131 = vld [vmem:[#allocation5 + $0x78] sm:$0xff]
    %v132 = vld [vmem:[#allocation5 + $0x80] sm:$0xff]
    %v133 = vld [vmem:[#allocation5 + $0x88] sm:$0xff]
    %v134 = vld [vmem:[#allocation5 + $0x90] sm:$0xff]
    %v135 = vld [vmem:[#allocation5 + $0x98] sm:$0xff]
    %v136 = vld [vmem:[#allocation5 + $0xa0] sm:$0xff]
    %v137 = vld [vmem:[#allocation5 + $0xa8] sm:$0xff]
    %v138 = vld [vmem:[#allocation5 + $0xb0] sm:$0xff]
    %v139 = vld [vmem:[#allocation5 + $0xb8] sm:$0xff]
    %v140 = vld [vmem:[#allocation5 + $0xc0] sm:$0xff]
    %v141 = vld [vmem:[#allocation5 + $0xc8] sm:$0xff]
    %v142 = vld [vmem:[#allocation5 + $0xd0] sm:$0xff]
    %v143 = vld [vmem:[#allocation5 + $0xd8] sm:$0xff]
    %v144 = vld [vmem:[#allocation5 + $0xe0] sm:$0xff]
    %v145 = vld [vmem:[#allocation5 + $0xe8] sm:$0xff]
    %v146 = vld [vmem:[#allocation5 + $0xf0] sm:$0xff]
    %v147 = vld [vmem:[#allocation5 + $0xf8] sm:$0xff]
    %v148 = vld [vmem:[#allocation5 + $0x100] sm:$0xff]
    %v149 = vld [vmem:[#allocation5 + $0x108] sm:$0xff]
    %v150 = vld [vmem:[#allocation5 + $0x110] sm:$0xff]
    %v151 = vld [vmem:[#allocation5 + $0x118] sm:$0xff]
    %v152 = vld [vmem:[#allocation5 + $0x120] sm:$0xff]
    %v153 = vld [vmem:[#allocation5 + $0x128] sm:$0xff]
    %v154 = vld [vmem:[#allocation5 + $0x130] sm:$0xff]
    %v155 = vld [vmem:[#allocation5 + $0x138] sm:$0xff]
    %v156 = vld [vmem:[#allocation5 + $0x140] sm:$0xff]
    %v157 = vld [vmem:[#allocation5 + $0x148] sm:$0xff]
    %v158 = vld [vmem:[#allocation5 + $0x150] sm:$0xff]
    %v159 = vld [vmem:[#allocation5 + $0x158] sm:$0xff]
    %v160 = vld [vmem:[#allocation5 + $0x160] sm:$0xff]
    %v161 = vld [vmem:[#allocation5 + $0x168] sm:$0xff]
    %v162 = vld [vmem:[#allocation5 + $0x170] sm:$0xff]
    %v163 = vld [vmem:[#allocation5 + $0x178] sm:$0xff]
    %v164 = vld [vmem:[#allocation5 + $0x180] sm:$0xff]
    %v165 = vld [vmem:[#allocation5 + $0x188] sm:$0xff]
    %v166 = vld [vmem:[#allocation5 + $0x190] sm:$0xff]
    %v167 = vld [vmem:[#allocation5 + $0x198] sm:$0xff]
    %v168 = vld [vmem:[#allocation5 + $0x1a0] sm:$0xff]
    %v169 = vld [vmem:[#allocation5 + $0x1a8] sm:$0xff]
    %v170 = vld [vmem:[#allocation5 + $0x1b0] sm:$0xff]
    %v171 = vld [vmem:[#allocation5 + $0x1b8] sm:$0xff]
    %v172 = vld [vmem:[#allocation5 + $0x1c0] sm:$0xff]
    %v173 = vld [vmem:[#allocation5 + $0x1c8] sm:$0xff]
    %v174 = vld [vmem:[#allocation5 + $0x1d0] sm:$0xff]
    %v175 = vld [vmem:[#allocation5 + $0x1d8] sm:$0xff]
    %v176 = vld [vmem:[#allocation5 + $0x1e0] sm:$0xff]
    %v177 = vld [vmem:[#allocation5 + $0x1e8] sm:$0xff]
    %v178 = vld [vmem:[#allocation5 + $0x1f0] sm:$0xff]
    %v179 = vld [vmem:[#allocation5 + $0x1f8] sm:$0xff]
    %v180 = vld [vmem:[#allocation7] sm:$0xf]
    %v182 = vperm.slane %v180, 0
    %v183 = vperm.slane %v180, 1
    %v184 = vperm.slane %v180, 2
    %v185 = vperm.slane %v180, 3
    %191 = vst [vmem:[#allocation1] ss:$9 sm:$0xff] %v115
    %v192 = vld [vmem:[#allocation1] sm:$0xff]
    %v193 = vld [vmem:[#allocation1 + $0x9] sm:$0xff]
    %v260 = vunpack.c.l.b16 %v116
    %v261 = vunpack.c.h.b16 %v116
    %v262 = vunpack.c.l.b16 %v117
    %v263 = vunpack.c.h.b16 %v117
    %v264 = vunpack.c.l.b16 %v118
    %v265 = vunpack.c.h.b16 %v118
    %v266 = vunpack.c.l.b16 %v119
    %v267 = vunpack.c.h.b16 %v119
    %v268 = vunpack.c.l.b16 %v120
    %v269 = vunpack.c.h.b16 %v120
    %v270 = vunpack.c.l.b16 %v121
    %v271 = vunpack.c.h.b16 %v121
    %v272 = vunpack.c.l.b16 %v122
    %v273 = vunpack.c.h.b16 %v122
    %v274 = vunpack.c.l.b16 %v123
    %v275 = vunpack.c.h.b16 %v123
    %v276 = vunpack.c.l.b16 %v124
    %v277 = vunpack.c.h.b16 %v124
    %v278 = vunpack.c.l.b16 %v125
    %v279 = vunpack.c.h.b16 %v125
    %v280 = vunpack.c.l.b16 %v126
    %v281 = vunpack.c.h.b16 %v126
    %v282 = vunpack.c.l.b16 %v127
    %v283 = vunpack.c.h.b16 %v127
    %v284 = vunpack.c.l.b16 %v128
    %v285 = vunpack.c.h.b16 %v128
    %v286 = vunpack.c.l.b16 %v129
    %v287 = vunpack.c.h.b16 %v129
    %v288 = vunpack.c.l.b16 %v130
    %v289 = vunpack.c.h.b16 %v130
    %v290 = vunpack.c.l.b16 %v131
    %v291 = vunpack.c.h.b16 %v131
    %v292 = vunpack.c.l.b16 %v132
    %v293 = vunpack.c.h.b16 %v132
    %v294 = vunpack.c.l.b16 %v133
    %v295 = vunpack.c.h.b16 %v133
    %v296 = vunpack.c.l.b16 %v134
    %v297 = vunpack.c.h.b16 %v134
    %v298 = vunpack.c.l.b16 %v135
    %v299 = vunpack.c.h.b16 %v135
    %v300 = vunpack.c.l.b16 %v136
    %v301 = vunpack.c.h.b16 %v136
    %v302 = vunpack.c.l.b16 %v137
    %v303 = vunpack.c.h.b16 %v137
    %v304 = vunpack.c.l.b16 %v138
    %v305 = vunpack.c.h.b16 %v138
    %v306 = vunpack.c.l.b16 %v139
    %v307 = vunpack.c.h.b16 %v139
    %v308 = vunpack.c.l.b16 %v140
    %v309 = vunpack.c.h.b16 %v140
    %v310 = vunpack.c.l.b16 %v141
    %v311 = vunpack.c.h.b16 %v141
    %v312 = vunpack.c.l.b16 %v142
    %v313 = vunpack.c.h.b16 %v142
    %v314 = vunpack.c.l.b16 %v143
    %v315 = vunpack.c.h.b16 %v143
    %v316 = vunpack.c.l.b16 %v144
    %v317 = vunpack.c.h.b16 %v144
    %v318 = vunpack.c.l.b16 %v145
    %v319 = vunpack.c.h.b16 %v145
    %v320 = vunpack.c.l.b16 %v146
    %v321 = vunpack.c.h.b16 %v146
    %v322 = vunpack.c.l.b16 %v147
    %v323 = vunpack.c.h.b16 %v147
    %v324 = vunpack.c.l.b16 %v148
    %v325 = vunpack.c.h.b16 %v148
    %v326 = vunpack.c.l.b16 %v149
    %v327 = vunpack.c.h.b16 %v149
    %v328 = vunpack.c.l.b16 %v150
    %v329 = vunpack.c.h.b16 %v150
    %v330 = vunpack.c.l.b16 %v151
    %v331 = vunpack.c.h.b16 %v151
    %v332 = vunpack.c.l.b16 %v152
    %v333 = vunpack.c.h.b16 %v152
    %v334 = vunpack.c.l.b16 %v153
    %v335 = vunpack.c.h.b16 %v153
    %v336 = vunpack.c.l.b16 %v154
    %v337 = vunpack.c.h.b16 %v154
    %v338 = vunpack.c.l.b16 %v155
    %v339 = vunpack.c.h.b16 %v155
    %v340 = vunpack.c.l.b16 %v156
    %v341 = vunpack.c.h.b16 %v156
    %v342 = vunpack.c.l.b16 %v157
    %v343 = vunpack.c.h.b16 %v157
    %v344 = vunpack.c.l.b16 %v158
    %v345 = vunpack.c.h.b16 %v158
    %v346 = vunpack.c.l.b16 %v159
    %v347 = vunpack.c.h.b16 %v159
    %v348 = vunpack.c.l.b16 %v160
    %v349 = vunpack.c.h.b16 %v160
    %v350 = vunpack.c.l.b16 %v161
    %v351 = vunpack.c.h.b16 %v161
    %v352 = vunpack.c.l.b16 %v162
    %v353 = vunpack.c.h.b16 %v162
    %v354 = vunpack.c.l.b16 %v163
    %v355 = vunpack.c.h.b16 %v163
    %v356 = vunpack.c.l.b16 %v164
    %v357 = vunpack.c.h.b16 %v164
    %v358 = vunpack.c.l.b16 %v165
    %v359 = vunpack.c.h.b16 %v165
    %v360 = vunpack.c.l.b16 %v166
    %v361 = vunpack.c.h.b16 %v166
    %v362 = vunpack.c.l.b16 %v167
    %v363 = vunpack.c.h.b16 %v167
    %v364 = vunpack.c.l.b16 %v168
    %v365 = vunpack.c.h.b16 %v168
    %v366 = vunpack.c.l.b16 %v169
    %v367 = vunpack.c.h.b16 %v169
    %v368 = vunpack.c.l.b16 %v170
    %v369 = vunpack.c.h.b16 %v170
    %v370 = vunpack.c.l.b16 %v171
    %v371 = vunpack.c.h.b16 %v171
    %v372 = vunpack.c.l.b16 %v172
    %v373 = vunpack.c.h.b16 %v172
    %v374 = vunpack.c.l.b16 %v173
    %v375 = vunpack.c.h.b16 %v173
    %v376 = vunpack.c.l.b16 %v174
    %v377 = vunpack.c.h.b16 %v174
    %v378 = vunpack.c.l.b16 %v175
    %v379 = vunpack.c.h.b16 %v175
    %v380 = vunpack.c.l.b16 %v176
    %v381 = vunpack.c.h.b16 %v176
    %v382 = vunpack.c.l.b16 %v177
    %v383 = vunpack.c.h.b16 %v177
    %v384 = vunpack.c.l.b16 %v178
    %v385 = vunpack.c.h.b16 %v178
    %v386 = vunpack.c.l.b16 %v179
    %v387 = vunpack.c.h.b16 %v179
    %v388 = vpack.c.b16 %v264, %v260
    %v389 = vpack.c.b16 %v265, %v261
    %v390 = vpack.c.b16 %v266, %v262
    %v391 = vpack.c.b16 %v267, %v263
    %v392 = vpack.c.b16 %v272, %v268
    %v393 = vpack.c.b16 %v273, %v269
    %v394 = vpack.c.b16 %v274, %v270
    %v395 = vpack.c.b16 %v275, %v271
    %v396 = vpack.c.b16 %v280, %v276
    %v397 = vpack.c.b16 %v281, %v277
    %v398 = vpack.c.b16 %v282, %v278
    %v399 = vpack.c.b16 %v283, %v279
    %v400 = vpack.c.b16 %v288, %v284
    %v401 = vpack.c.b16 %v289, %v285
    %v402 = vpack.c.b16 %v290, %v286
    %v403 = vpack.c.b16 %v291, %v287
    %v404 = vpack.c.b16 %v296, %v292
    %v405 = vpack.c.b16 %v297, %v293
    %v406 = vpack.c.b16 %v298, %v294
    %v407 = vpack.c.b16 %v299, %v295
    %v408 = vpack.c.b16 %v304, %v300
    %v409 = vpack.c.b16 %v305, %v301
    %v410 = vpack.c.b16 %v306, %v302
    %v411 = vpack.c.b16 %v307, %v303
    %v412 = vpack.c.b16 %v312, %v308
    %v413 = vpack.c.b16 %v313, %v309
    %v414 = vpack.c.b16 %v314, %v310
    %v415 = vpack.c.b16 %v315, %v311
    %v416 = vpack.c.b16 %v320, %v316
    %v417 = vpack.c.b16 %v321, %v317
    %v418 = vpack.c.b16 %v322, %v318
    %v419 = vpack.c.b16 %v323, %v319
    %v420 = vpack.c.b16 %v328, %v324
    %v421 = vpack.c.b16 %v329, %v325
    %v422 = vpack.c.b16 %v330, %v326
    %v423 = vpack.c.b16 %v331, %v327
    %v424 = vpack.c.b16 %v336, %v332
    %v425 = vpack.c.b16 %v337, %v333
    %v426 = vpack.c.b16 %v338, %v334
    %v427 = vpack.c.b16 %v339, %v335
    %v428 = vpack.c.b16 %v344, %v340
    %v429 = vpack.c.b16 %v345, %v341
    %v430 = vpack.c.b16 %v346, %v342
    %v431 = vpack.c.b16 %v347, %v343
    %v432 = vpack.c.b16 %v352, %v348
    %v433 = vpack.c.b16 %v353, %v349
    %v434 = vpack.c.b16 %v354, %v350
    %v435 = vpack.c.b16 %v355, %v351
    %v436 = vpack.c.b16 %v360, %v356
    %v437 = vpack.c.b16 %v361, %v357
    %v438 = vpack.c.b16 %v362, %v358
    %v439 = vpack.c.b16 %v363, %v359
    %v440 = vpack.c.b16 %v368, %v364
    %v441 = vpack.c.b16 %v369, %v365
    %v442 = vpack.c.b16 %v370, %v366
    %v443 = vpack.c.b16 %v371, %v367
    %v444 = vpack.c.b16 %v376, %v372
    %v445 = vpack.c.b16 %v377, %v373
    %v446 = vpack.c.b16 %v378, %v374
    %v447 = vpack.c.b16 %v379, %v375
    %v448 = vpack.c.b16 %v384, %v380
    %v449 = vpack.c.b16 %v385, %v381
    %v450 = vpack.c.b16 %v386, %v382
    %v451 = vpack.c.b16 %v387, %v383
    %516 = vmatpush.bf16.msra.mxu0 %v416
    %517 = vmatpush.bf16.msra.mxu0 %v412
    %518 = vmatpush.bf16.msra.mxu0 %v408
    %519 = vmatpush.bf16.msra.mxu0 %v404
    %520 = vmatpush.bf16.msra.mxu0 %v400
    %521 = vmatpush.bf16.msra.mxu0 %v396
    %522 = vmatpush.bf16.msra.mxu0 %v392
    %523 = vmatpush.bf16.msra.mxu0 %v388
    %524 = vmatmul.bf16.gmra.mxu0 %v192
    %v525 = vpop.f32.mrf.mxu0
    %v526 = vadd.f32 %v182, %v525
    %v527 = vpop.f32.mrf.mxu0
    %528 = vdwg.mxu0
    %529 = vmatpush.bf16.msra.mxu0 %v448
    %530 = vmatpush.bf16.msra.mxu0 %v444
    %531 = vmatpush.bf16.msra.mxu0 %v440
    %532 = vmatpush.bf16.msra.mxu0 %v436
    %533 = vmatpush.bf16.msra.mxu0 %v432
    %534 = vmatpush.bf16.msra.mxu0 %v428
    %535 = vmatpush.bf16.msra.mxu0 %v424
    %536 = vmatpush.bf16.msra.mxu0 %v420
    %537 = vmatmul.bf16.gmra.mxu0 %v193
    %v538 = vpop.f32.mrf.mxu0
    %v539 = vadd.f32 %v526, %v538
    %v540 = vpop.f32.mrf.mxu0
    %541 = vdwg.mxu0
    %542 = vmatpush.bf16.msra.mxu0 %v417
    %543 = vmatpush.bf16.msra.mxu0 %v413
    %544 = vmatpush.bf16.msra.mxu0 %v409
    %545 = vmatpush.bf16.msra.mxu0 %v405
    %546 = vmatpush.bf16.msra.mxu0 %v401
    %547 = vmatpush.bf16.msra.mxu0 %v397
    %548 = vmatpush.bf16.msra.mxu0 %v393
    %549 = vmatpush.bf16.msra.mxu0 %v389
    %550 = vmatmul.bf16.gmra.mxu0 %v192
    %v551 = vpop.f32.mrf.mxu0
    %v552 = vadd.f32 %v183, %v551
    %v553 = vpop.f32.mrf.mxu0
    %554 = vdwg.mxu0
    %555 = vmatpush.bf16.msra.mxu0 %v449
    %556 = vmatpush.bf16.msra.mxu0 %v445
    %557 = vmatpush.bf16.msra.mxu0 %v441
    %558 = vmatpush.bf16.msra.mxu0 %v437
    %559 = vmatpush.bf16.msra.mxu0 %v433
    %560 = vmatpush.bf16.msra.mxu0 %v429
    %561 = vmatpush.bf16.msra.mxu0 %v425
    %562 = vmatpush.bf16.msra.mxu0 %v421
    %563 = vmatmul.bf16.gmra.mxu0 %v193
    %v564 = vpop.f32.mrf.mxu0
    %v565 = vadd.f32 %v552, %v564
    %v566 = vpop.f32.mrf.mxu0
    %567 = vdwg.mxu0
    %568 = vmatpush.bf16.msra.mxu0 %v418
    %569 = vmatpush.bf16.msra.mxu0 %v414
    %570 = vmatpush.bf16.msra.mxu0 %v410
    %571 = vmatpush.bf16.msra.mxu0 %v406
    %572 = vmatpush.bf16.msra.mxu0 %v402
    %573 = vmatpush.bf16.msra.mxu0 %v398
    %574 = vmatpush.bf16.msra.mxu0 %v394
    %575 = vmatpush.bf16.msra.mxu0 %v390
    %576 = vmatmul.bf16.gmra.mxu0 %v192
    %v577 = vpop.f32.mrf.mxu0
    %v578 = vadd.f32 %v184, %v577
    %v579 = vpop.f32.mrf.mxu0
    %580 = vdwg.mxu0
    %581 = vmatpush.bf16.msra.mxu0 %v450
    %582 = vmatpush.bf16.msra.mxu0 %v446
    %583 = vmatpush.bf16.msra.mxu0 %v442
    %584 = vmatpush.bf16.msra.mxu0 %v438
    %585 = vmatpush.bf16.msra.mxu0 %v434
    %586 = vmatpush.bf16.msra.mxu0 %v430
    %587 = vmatpush.bf16.msra.mxu0 %v426
    %588 = vmatpush.bf16.msra.mxu0 %v422
    %589 = vmatmul.bf16.gmra.mxu0 %v193
    %v590 = vpop.f32.mrf.mxu0
    %v591 = vadd.f32 %v578, %v590
    %v592 = vpop.f32.mrf.mxu0
    %593 = vdwg.mxu0
    %594 = vmatpush.bf16.msra.mxu0 %v419
    %595 = vmatpush.bf16.msra.mxu0 %v415
    %596 = vmatpush.bf16.msra.mxu0 %v411
    %597 = vmatpush.bf16.msra.mxu0 %v407
    %598 = vmatpush.bf16.msra.mxu0 %v403
    %599 = vmatpush.bf16.msra.mxu0 %v399
    %600 = vmatpush.bf16.msra.mxu0 %v395
    %601 = vmatpush.bf16.msra.mxu0 %v391
    %602 = vmatmul.bf16.gmra.mxu0 %v192
    %v603 = vpop.f32.mrf.mxu0
    %v604 = vadd.f32 %v185, %v603
    %v605 = vpop.f32.mrf.mxu0
    %606 = vdwg.mxu0
    %607 = vmatpush.bf16.msra.mxu0 %v451
    %608 = vmatpush.bf16.msra.mxu0 %v447
    %609 = vmatpush.bf16.msra.mxu0 %v443
    %610 = vmatpush.bf16.msra.mxu0 %v439
    %611 = vmatpush.bf16.msra.mxu0 %v435
    %612 = vmatpush.bf16.msra.mxu0 %v431
    %613 = vmatpush.bf16.msra.mxu0 %v427
    %614 = vmatpush.bf16.msra.mxu0 %v423
    %615 = vmatmul.bf16.gmra.mxu0 %v193
    %v616 = vpop.f32.mrf.mxu0
    %v617 = vadd.f32 %v604, %v616
    %v618 = vpop.f32.mrf.mxu0
    %619 = vdwg.mxu0
    %v620 = vmax.f32 %v539, 0.0
    %v621 = vmax.f32 %v565, 0.0
    %v622 = vmax.f32 %v591, 0.0
    %v623 = vmax.f32 %v617, 0.0
    %v624 = vpack.c.bf16 %v620, %v620
    %v625 = vpack.c.bf16 %v621, %v621
    %v626 = vpack.c.bf16 %v622, %v622
    %v627 = vpack.c.bf16 %v623, %v623
    %v628 = vld [vmem:[#allocation8] sm:$0xff]
    %v629 = vld [vmem:[#allocation8 + $0x8] sm:$0xff]
    %v630 = vld [vmem:[#allocation8 + $0x10] sm:$0xff]
    %v631 = vld [vmem:[#allocation8 + $0x18] sm:$0xff]
    %v632 = vld [vmem:[#allocation8 + $0x20] sm:$0xff]
    %v633 = vld [vmem:[#allocation8 + $0x28] sm:$0xff]
    %v634 = vld [vmem:[#allocation8 + $0x30] sm:$0xff]
    %v635 = vld [vmem:[#allocation8 + $0x38] sm:$0xff]
    %v636 = vld [vmem:[#allocation8 + $0x40] sm:$0xff]
    %v637 = vld [vmem:[#allocation8 + $0x48] sm:$0xff]
    %v638 = vld [vmem:[#allocation8 + $0x50] sm:$0xff]
    %v639 = vld [vmem:[#allocation8 + $0x58] sm:$0xff]
    %v640 = vld [vmem:[#allocation8 + $0x60] sm:$0xff]
    %v641 = vld [vmem:[#allocation8 + $0x68] sm:$0xff]
    %v642 = vld [vmem:[#allocation8 + $0x70] sm:$0xff]
    %v643 = vld [vmem:[#allocation8 + $0x78] sm:$0xff]
    %v644 = vld [vmem:[#allocation8 + $0x80] sm:$0xff]
    %v645 = vld [vmem:[#allocation8 + $0x88] sm:$0xff]
    %v646 = vld [vmem:[#allocation8 + $0x90] sm:$0xff]
    %v647 = vld [vmem:[#allocation8 + $0x98] sm:$0xff]
    %v648 = vld [vmem:[#allocation8 + $0xa0] sm:$0xff]
    %v649 = vld [vmem:[#allocation8 + $0xa8] sm:$0xff]
    %v650 = vld [vmem:[#allocation8 + $0xb0] sm:$0xff]
    %v651 = vld [vmem:[#allocation8 + $0xb8] sm:$0xff]
    %v652 = vld [vmem:[#allocation8 + $0xc0] sm:$0xff]
    %v653 = vld [vmem:[#allocation8 + $0xc8] sm:$0xff]
    %v654 = vld [vmem:[#allocation8 + $0xd0] sm:$0xff]
    %v655 = vld [vmem:[#allocation8 + $0xd8] sm:$0xff]
    %v656 = vld [vmem:[#allocation8 + $0xe0] sm:$0xff]
    %v657 = vld [vmem:[#allocation8 + $0xe8] sm:$0xff]
    %v658 = vld [vmem:[#allocation8 + $0xf0] sm:$0xff]
    %v659 = vld [vmem:[#allocation8 + $0xf8] sm:$0xff]
    %v660 = vld [vmem:[#allocation8 + $0x100] sm:$0xff]
    %v661 = vld [vmem:[#allocation8 + $0x108] sm:$0xff]
    %v662 = vld [vmem:[#allocation8 + $0x110] sm:$0xff]
    %v663 = vld [vmem:[#allocation8 + $0x118] sm:$0xff]
    %v664 = vld [vmem:[#allocation8 + $0x120] sm:$0xff]
    %v665 = vld [vmem:[#allocation8 + $0x128] sm:$0xff]
    %v666 = vld [vmem:[#allocation8 + $0x130] sm:$0xff]
    %v667 = vld [vmem:[#allocation8 + $0x138] sm:$0xff]
    %v668 = vld [vmem:[#allocation8 + $0x140] sm:$0xff]
    %v669 = vld [vmem:[#allocation8 + $0x148] sm:$0xff]
    %v670 = vld [vmem:[#allocation8 + $0x150] sm:$0xff]
    %v671 = vld [vmem:[#allocation8 + $0x158] sm:$0xff]
    %v672 = vld [vmem:[#allocation8 + $0x160] sm:$0xff]
    %v673 = vld [vmem:[#allocation8 + $0x168] sm:$0xff]
    %v674 = vld [vmem:[#allocation8 + $0x170] sm:$0xff]
    %v675 = vld [vmem:[#allocation8 + $0x178] sm:$0xff]
    %v676 = vld [vmem:[#allocation8 + $0x180] sm:$0xff]
    %v677 = vld [vmem:[#allocation8 + $0x188] sm:$0xff]
    %v678 = vld [vmem:[#allocation8 + $0x190] sm:$0xff]
    %v679 = vld [vmem:[#allocation8 + $0x198] sm:$0xff]
    %v680 = vld [vmem:[#allocation8 + $0x1a0] sm:$0xff]
    %v681 = vld [vmem:[#allocation8 + $0x1a8] sm:$0xff]
    %v682 = vld [vmem:[#allocation8 + $0x1b0] sm:$0xff]
    %v683 = vld [vmem:[#allocation8 + $0x1b8] sm:$0xff]
    %v684 = vld [vmem:[#allocation8 + $0x1c0] sm:$0xff]
    %v685 = vld [vmem:[#allocation8 + $0x1c8] sm:$0xff]
    %v686 = vld [vmem:[#allocation8 + $0x1d0] sm:$0xff]
    %v687 = vld [vmem:[#allocation8 + $0x1d8] sm:$0xff]
    %v688 = vld [vmem:[#allocation8 + $0x1e0] sm:$0xff]
    %v689 = vld [vmem:[#allocation8 + $0x1e8] sm:$0xff]
    %v690 = vld [vmem:[#allocation8 + $0x1f0] sm:$0xff]
    %v691 = vld [vmem:[#allocation8 + $0x1f8] sm:$0xff]
    %v692 = vld [vmem:[#allocation8 + $0x200] sm:$0xff]
    %v693 = vld [vmem:[#allocation8 + $0x208] sm:$0xff]
    %v694 = vld [vmem:[#allocation8 + $0x210] sm:$0xff]
    %v695 = vld [vmem:[#allocation8 + $0x218] sm:$0xff]
    %v696 = vld [vmem:[#allocation8 + $0x220] sm:$0xff]
    %v697 = vld [vmem:[#allocation8 + $0x228] sm:$0xff]
    %v698 = vld [vmem:[#allocation8 + $0x230] sm:$0xff]
    %v699 = vld [vmem:[#allocation8 + $0x238] sm:$0xff]
    %v700 = vld [vmem:[#allocation8 + $0x240] sm:$0xff]
    %v701 = vld [vmem:[#allocation8 + $0x248] sm:$0xff]
    %v702 = vld [vmem:[#allocation8 + $0x250] sm:$0xff]
    %v703 = vld [vmem:[#allocation8 + $0x258] sm:$0xff]
    %v704 = vld [vmem:[#allocation8 + $0x260] sm:$0xff]
    %v705 = vld [vmem:[#allocation8 + $0x268] sm:$0xff]
    %v706 = vld [vmem:[#allocation8 + $0x270] sm:$0xff]
    %v707 = vld [vmem:[#allocation8 + $0x278] sm:$0xff]
    %v708 = vld [vmem:[#allocation8 + $0x280] sm:$0xff]
    %v709 = vld [vmem:[#allocation8 + $0x288] sm:$0xff]
    %v710 = vld [vmem:[#allocation8 + $0x290] sm:$0xff]
    %v711 = vld [vmem:[#allocation8 + $0x298] sm:$0xff]
    %v712 = vld [vmem:[#allocation8 + $0x2a0] sm:$0xff]
    %v713 = vld [vmem:[#allocation8 + $0x2a8] sm:$0xff]
    %v714 = vld [vmem:[#allocation8 + $0x2b0] sm:$0xff]
    %v715 = vld [vmem:[#allocation8 + $0x2b8] sm:$0xff]
    %v716 = vld [vmem:[#allocation8 + $0x2c0] sm:$0xff]
    %v717 = vld [vmem:[#allocation8 + $0x2c8] sm:$0xff]
    %v718 = vld [vmem:[#allocation8 + $0x2d0] sm:$0xff]
    %v719 = vld [vmem:[#allocation8 + $0x2d8] sm:$0xff]
    %v720 = vld [vmem:[#allocation8 + $0x2e0] sm:$0xff]
    %v721 = vld [vmem:[#allocation8 + $0x2e8] sm:$0xff]
    %v722 = vld [vmem:[#allocation8 + $0x2f0] sm:$0xff]
    %v723 = vld [vmem:[#allocation8 + $0x2f8] sm:$0xff]
    %v724 = vld [vmem:[#allocation8 + $0x300] sm:$0xff]
    %v725 = vld [vmem:[#allocation8 + $0x308] sm:$0xff]
    %v726 = vld [vmem:[#allocation8 + $0x310] sm:$0xff]
    %v727 = vld [vmem:[#allocation8 + $0x318] sm:$0xff]
    %v728 = vld [vmem:[#allocation8 + $0x320] sm:$0xff]
    %v729 = vld [vmem:[#allocation8 + $0x328] sm:$0xff]
    %v730 = vld [vmem:[#allocation8 + $0x330] sm:$0xff]
    %v731 = vld [vmem:[#allocation8 + $0x338] sm:$0xff]
    %v732 = vld [vmem:[#allocation8 + $0x340] sm:$0xff]
    %v733 = vld [vmem:[#allocation8 + $0x348] sm:$0xff]
    %v734 = vld [vmem:[#allocation8 + $0x350] sm:$0xff]
    %v735 = vld [vmem:[#allocation8 + $0x358] sm:$0xff]
    %v736 = vld [vmem:[#allocation8 + $0x360] sm:$0xff]
    %v737 = vld [vmem:[#allocation8 + $0x368] sm:$0xff]
    %v738 = vld [vmem:[#allocation8 + $0x370] sm:$0xff]
    %v739 = vld [vmem:[#allocation8 + $0x378] sm:$0xff]
    %v740 = vld [vmem:[#allocation8 + $0x380] sm:$0xff]
    %v741 = vld [vmem:[#allocation8 + $0x388] sm:$0xff]
    %v742 = vld [vmem:[#allocation8 + $0x390] sm:$0xff]
    %v743 = vld [vmem:[#allocation8 + $0x398] sm:$0xff]
    %v744 = vld [vmem:[#allocation8 + $0x3a0] sm:$0xff]
    %v745 = vld [vmem:[#allocation8 + $0x3a8] sm:$0xff]
    %v746 = vld [vmem:[#allocation8 + $0x3b0] sm:$0xff]
    %v747 = vld [vmem:[#allocation8 + $0x3b8] sm:$0xff]
    %v748 = vld [vmem:[#allocation8 + $0x3c0] sm:$0xff]
    %v749 = vld [vmem:[#allocation8 + $0x3c8] sm:$0xff]
    %v750 = vld [vmem:[#allocation8 + $0x3d0] sm:$0xff]
    %v751 = vld [vmem:[#allocation8 + $0x3d8] sm:$0xff]
    %v752 = vld [vmem:[#allocation8 + $0x3e0] sm:$0xff]
    %v753 = vld [vmem:[#allocation8 + $0x3e8] sm:$0xff]
    %v754 = vld [vmem:[#allocation8 + $0x3f0] sm:$0xff]
    %v755 = vld [vmem:[#allocation8 + $0x3f8] sm:$0xff]
    %v756 = vld [vmem:[#allocation10] sm:$0xf]
    %v758 = vperm.slane %v756, 0
    %v759 = vperm.slane %v756, 1
    %v760 = vperm.slane %v756, 2
    %v761 = vperm.slane %v756, 3
    %v894 = vunpack.c.l.b16 %v628
    %v895 = vunpack.c.h.b16 %v628
    %v896 = vunpack.c.l.b16 %v629
    %v897 = vunpack.c.h.b16 %v629
    %v898 = vunpack.c.l.b16 %v630
    %v899 = vunpack.c.h.b16 %v630
    %v900 = vunpack.c.l.b16 %v631
    %v901 = vunpack.c.h.b16 %v631
    %v902 = vunpack.c.l.b16 %v632
    %v903 = vunpack.c.h.b16 %v632
    %v904 = vunpack.c.l.b16 %v633
    %v905 = vunpack.c.h.b16 %v633
    %v906 = vunpack.c.l.b16 %v634
    %v907 = vunpack.c.h.b16 %v634
    %v908 = vunpack.c.l.b16 %v635
    %v909 = vunpack.c.h.b16 %v635
    %v910 = vunpack.c.l.b16 %v636
    %v911 = vunpack.c.h.b16 %v636
    %v912 = vunpack.c.l.b16 %v637
    %v913 = vunpack.c.h.b16 %v637
    %v914 = vunpack.c.l.b16 %v638
    %v915 = vunpack.c.h.b16 %v638
    %v916 = vunpack.c.l.b16 %v639
    %v917 = vunpack.c.h.b16 %v639
    %v918 = vunpack.c.l.b16 %v640
    %v919 = vunpack.c.h.b16 %v640
    %v920 = vunpack.c.l.b16 %v641
    %v921 = vunpack.c.h.b16 %v641
    %v922 = vunpack.c.l.b16 %v642
    %v923 = vunpack.c.h.b16 %v642
    %v924 = vunpack.c.l.b16 %v643
    %v925 = vunpack.c.h.b16 %v643
    %v926 = vunpack.c.l.b16 %v644
    %v927 = vunpack.c.h.b16 %v644
    %v928 = vunpack.c.l.b16 %v645
    %v929 = vunpack.c.h.b16 %v645
    %v930 = vunpack.c.l.b16 %v646
    %v931 = vunpack.c.h.b16 %v646
    %v932 = vunpack.c.l.b16 %v647
    %v933 = vunpack.c.h.b16 %v647
    %v934 = vunpack.c.l.b16 %v648
    %v935 = vunpack.c.h.b16 %v648
    %v936 = vunpack.c.l.b16 %v649
    %v937 = vunpack.c.h.b16 %v649
    %v938 = vunpack.c.l.b16 %v650
    %v939 = vunpack.c.h.b16 %v650
    %v940 = vunpack.c.l.b16 %v651
    %v941 = vunpack.c.h.b16 %v651
    %v942 = vunpack.c.l.b16 %v652
    %v943 = vunpack.c.h.b16 %v652
    %v944 = vunpack.c.l.b16 %v653
    %v945 = vunpack.c.h.b16 %v653
    %v946 = vunpack.c.l.b16 %v654
    %v947 = vunpack.c.h.b16 %v654
    %v948 = vunpack.c.l.b16 %v655
    %v949 = vunpack.c.h.b16 %v655
    %v950 = vunpack.c.l.b16 %v656
    %v951 = vunpack.c.h.b16 %v656
    %v952 = vunpack.c.l.b16 %v657
    %v953 = vunpack.c.h.b16 %v657
    %v954 = vunpack.c.l.b16 %v658
    %v955 = vunpack.c.h.b16 %v658
    %v956 = vunpack.c.l.b16 %v659
    %v957 = vunpack.c.h.b16 %v659
    %v958 = vunpack.c.l.b16 %v660
    %v959 = vunpack.c.h.b16 %v660
    %v960 = vunpack.c.l.b16 %v661
    %v961 = vunpack.c.h.b16 %v661
    %v962 = vunpack.c.l.b16 %v662
    %v963 = vunpack.c.h.b16 %v662
    %v964 = vunpack.c.l.b16 %v663
    %v965 = vunpack.c.h.b16 %v663
    %v966 = vunpack.c.l.b16 %v664
    %v967 = vunpack.c.h.b16 %v664
    %v968 = vunpack.c.l.b16 %v665
    %v969 = vunpack.c.h.b16 %v665
    %v970 = vunpack.c.l.b16 %v666
    %v971 = vunpack.c.h.b16 %v666
    %v972 = vunpack.c.l.b16 %v667
    %v973 = vunpack.c.h.b16 %v667
    %v974 = vunpack.c.l.b16 %v668
    %v975 = vunpack.c.h.b16 %v668
    %v976 = vunpack.c.l.b16 %v669
    %v977 = vunpack.c.h.b16 %v669
    %v978 = vunpack.c.l.b16 %v670
    %v979 = vunpack.c.h.b16 %v670
    %v980 = vunpack.c.l.b16 %v671
    %v981 = vunpack.c.h.b16 %v671
    %v982 = vunpack.c.l.b16 %v672
    %v983 = vunpack.c.h.b16 %v672
    %v984 = vunpack.c.l.b16 %v673
    %v985 = vunpack.c.h.b16 %v673
    %v986 = vunpack.c.l.b16 %v674
    %v987 = vunpack.c.h.b16 %v674
    %v988 = vunpack.c.l.b16 %v675
    %v989 = vunpack.c.h.b16 %v675
    %v990 = vunpack.c.l.b16 %v676
    %v991 = vunpack.c.h.b16 %v676
    %v992 = vunpack.c.l.b16 %v677
    %v993 = vunpack.c.h.b16 %v677
    %v994 = vunpack.c.l.b16 %v678
    %v995 = vunpack.c.h.b16 %v678
    %v996 = vunpack.c.l.b16 %v679
    %v997 = vunpack.c.h.b16 %v679
    %v998 = vunpack.c.l.b16 %v680
    %v999 = vunpack.c.h.b16 %v680
    %v1000 = vunpack.c.l.b16 %v681
    %v1001 = vunpack.c.h.b16 %v681
    %v1002 = vunpack.c.l.b16 %v682
    %v1003 = vunpack.c.h.b16 %v682
    %v1004 = vunpack.c.l.b16 %v683
    %v1005 = vunpack.c.h.b16 %v683
    %v1006 = vunpack.c.l.b16 %v684
    %v1007 = vunpack.c.h.b16 %v684
    %v1008 = vunpack.c.l.b16 %v685
    %v1009 = vunpack.c.h.b16 %v685
    %v1010 = vunpack.c.l.b16 %v686
    %v1011 = vunpack.c.h.b16 %v686
    %v1012 = vunpack.c.l.b16 %v687
    %v1013 = vunpack.c.h.b16 %v687
    %v1014 = vunpack.c.l.b16 %v688
    %v1015 = vunpack.c.h.b16 %v688
    %v1016 = vunpack.c.l.b16 %v689
    %v1017 = vunpack.c.h.b16 %v689
    %v1018 = vunpack.c.l.b16 %v690
    %v1019 = vunpack.c.h.b16 %v690
    %v1020 = vunpack.c.l.b16 %v691
    %v1021 = vunpack.c.h.b16 %v691
    %v1022 = vunpack.c.l.b16 %v692
    %v1023 = vunpack.c.h.b16 %v692
    %v1024 = vunpack.c.l.b16 %v693
    %v1025 = vunpack.c.h.b16 %v693
    %v1026 = vunpack.c.l.b16 %v694
    %v1027 = vunpack.c.h.b16 %v694
    %v1028 = vunpack.c.l.b16 %v695
    %v1029 = vunpack.c.h.b16 %v695
    %v1030 = vunpack.c.l.b16 %v696
    %v1031 = vunpack.c.h.b16 %v696
    %v1032 = vunpack.c.l.b16 %v697
    %v1033 = vunpack.c.h.b16 %v697
    %v1034 = vunpack.c.l.b16 %v698
    %v1035 = vunpack.c.h.b16 %v698
    %v1036 = vunpack.c.l.b16 %v699
    %v1037 = vunpack.c.h.b16 %v699
    %v1038 = vunpack.c.l.b16 %v700
    %v1039 = vunpack.c.h.b16 %v700
    %v1040 = vunpack.c.l.b16 %v701
    %v1041 = vunpack.c.h.b16 %v701
    %v1042 = vunpack.c.l.b16 %v702
    %v1043 = vunpack.c.h.b16 %v702
    %v1044 = vunpack.c.l.b16 %v703
    %v1045 = vunpack.c.h.b16 %v703
    %v1046 = vunpack.c.l.b16 %v704
    %v1047 = vunpack.c.h.b16 %v704
    %v1048 = vunpack.c.l.b16 %v705
    %v1049 = vunpack.c.h.b16 %v705
    %v1050 = vunpack.c.l.b16 %v706
    %v1051 = vunpack.c.h.b16 %v706
    %v1052 = vunpack.c.l.b16 %v707
    %v1053 = vunpack.c.h.b16 %v707
    %v1054 = vunpack.c.l.b16 %v708
    %v1055 = vunpack.c.h.b16 %v708
    %v1056 = vunpack.c.l.b16 %v709
    %v1057 = vunpack.c.h.b16 %v709
    %v1058 = vunpack.c.l.b16 %v710
    %v1059 = vunpack.c.h.b16 %v710
    %v1060 = vunpack.c.l.b16 %v711
    %v1061 = vunpack.c.h.b16 %v711
    %v1062 = vunpack.c.l.b16 %v712
    %v1063 = vunpack.c.h.b16 %v712
    %v1064 = vunpack.c.l.b16 %v713
    %v1065 = vunpack.c.h.b16 %v713
    %v1066 = vunpack.c.l.b16 %v714
    %v1067 = vunpack.c.h.b16 %v714
    %v1068 = vunpack.c.l.b16 %v715
    %v1069 = vunpack.c.h.b16 %v715
    %v1070 = vunpack.c.l.b16 %v716
    %v1071 = vunpack.c.h.b16 %v716
    %v1072 = vunpack.c.l.b16 %v717
    %v1073 = vunpack.c.h.b16 %v717
    %v1074 = vunpack.c.l.b16 %v718
    %v1075 = vunpack.c.h.b16 %v718
    %v1076 = vunpack.c.l.b16 %v719
    %v1077 = vunpack.c.h.b16 %v719
    %v1078 = vunpack.c.l.b16 %v720
    %v1079 = vunpack.c.h.b16 %v720
    %v1080 = vunpack.c.l.b16 %v721
    %v1081 = vunpack.c.h.b16 %v721
    %v1082 = vunpack.c.l.b16 %v722
    %v1083 = vunpack.c.h.b16 %v722
    %v1084 = vunpack.c.l.b16 %v723
    %v1085 = vunpack.c.h.b16 %v723
    %v1086 = vunpack.c.l.b16 %v724
    %v1087 = vunpack.c.h.b16 %v724
    %v1088 = vunpack.c.l.b16 %v725
    %v1089 = vunpack.c.h.b16 %v725
    %v1090 = vunpack.c.l.b16 %v726
    %v1091 = vunpack.c.h.b16 %v726
    %v1092 = vunpack.c.l.b16 %v727
    %v1093 = vunpack.c.h.b16 %v727
    %v1094 = vunpack.c.l.b16 %v728
    %v1095 = vunpack.c.h.b16 %v728
    %v1096 = vunpack.c.l.b16 %v729
    %v1097 = vunpack.c.h.b16 %v729
    %v1098 = vunpack.c.l.b16 %v730
    %v1099 = vunpack.c.h.b16 %v730
    %v1100 = vunpack.c.l.b16 %v731
    %v1101 = vunpack.c.h.b16 %v731
    %v1102 = vunpack.c.l.b16 %v732
    %v1103 = vunpack.c.h.b16 %v732
    %v1104 = vunpack.c.l.b16 %v733
    %v1105 = vunpack.c.h.b16 %v733
    %v1106 = vunpack.c.l.b16 %v734
    %v1107 = vunpack.c.h.b16 %v734
    %v1108 = vunpack.c.l.b16 %v735
    %v1109 = vunpack.c.h.b16 %v735
    %v1110 = vunpack.c.l.b16 %v736
    %v1111 = vunpack.c.h.b16 %v736
    %v1112 = vunpack.c.l.b16 %v737
    %v1113 = vunpack.c.h.b16 %v737
    %v1114 = vunpack.c.l.b16 %v738
    %v1115 = vunpack.c.h.b16 %v738
    %v1116 = vunpack.c.l.b16 %v739
    %v1117 = vunpack.c.h.b16 %v739
    %v1118 = vunpack.c.l.b16 %v740
    %v1119 = vunpack.c.h.b16 %v740
    %v1120 = vunpack.c.l.b16 %v741
    %v1121 = vunpack.c.h.b16 %v741
    %v1122 = vunpack.c.l.b16 %v742
    %v1123 = vunpack.c.h.b16 %v742
    %v1124 = vunpack.c.l.b16 %v743
    %v1125 = vunpack.c.h.b16 %v743
    %v1126 = vunpack.c.l.b16 %v744
    %v1127 = vunpack.c.h.b16 %v744
    %v1128 = vunpack.c.l.b16 %v745
    %v1129 = vunpack.c.h.b16 %v745
    %v1130 = vunpack.c.l.b16 %v746
    %v1131 = vunpack.c.h.b16 %v746
    %v1132 = vunpack.c.l.b16 %v747
    %v1133 = vunpack.c.h.b16 %v747
    %v1134 = vunpack.c.l.b16 %v748
    %v1135 = vunpack.c.h.b16 %v748
    %v1136 = vunpack.c.l.b16 %v749
    %v1137 = vunpack.c.h.b16 %v749
    %v1138 = vunpack.c.l.b16 %v750
    %v1139 = vunpack.c.h.b16 %v750
    %v1140 = vunpack.c.l.b16 %v751
    %v1141 = vunpack.c.h.b16 %v751
    %v1142 = vunpack.c.l.b16 %v752
    %v1143 = vunpack.c.h.b16 %v752
    %v1144 = vunpack.c.l.b16 %v753
    %v1145 = vunpack.c.h.b16 %v753
    %v1146 = vunpack.c.l.b16 %v754
    %v1147 = vunpack.c.h.b16 %v754
    %v1148 = vunpack.c.l.b16 %v755
    %v1149 = vunpack.c.h.b16 %v755
    %v1150 = vpack.c.b16 %v898, %v894
    %v1151 = vpack.c.b16 %v899, %v895
    %v1152 = vpack.c.b16 %v900, %v896
    %v1153 = vpack.c.b16 %v901, %v897
    %v1154 = vpack.c.b16 %v906, %v902
    %v1155 = vpack.c.b16 %v907, %v903
    %v1156 = vpack.c.b16 %v908, %v904
    %v1157 = vpack.c.b16 %v909, %v905
    %v1158 = vpack.c.b16 %v914, %v910
    %v1159 = vpack.c.b16 %v915, %v911
    %v1160 = vpack.c.b16 %v916, %v912
    %v1161 = vpack.c.b16 %v917, %v913
    %v1162 = vpack.c.b16 %v922, %v918
    %v1163 = vpack.c.b16 %v923, %v919
    %v1164 = vpack.c.b16 %v924, %v920
    %v1165 = vpack.c.b16 %v925, %v921
    %v1166 = vpack.c.b16 %v930, %v926
    %v1167 = vpack.c.b16 %v931, %v927
    %v1168 = vpack.c.b16 %v932, %v928
    %v1169 = vpack.c.b16 %v933, %v929
    %v1170 = vpack.c.b16 %v938, %v934
    %v1171 = vpack.c.b16 %v939, %v935
    %v1172 = vpack.c.b16 %v940, %v936
    %v1173 = vpack.c.b16 %v941, %v937
    %v1174 = vpack.c.b16 %v946, %v942
    %v1175 = vpack.c.b16 %v947, %v943
    %v1176 = vpack.c.b16 %v948, %v944
    %v1177 = vpack.c.b16 %v949, %v945
    %v1178 = vpack.c.b16 %v954, %v950
    %v1179 = vpack.c.b16 %v955, %v951
    %v1180 = vpack.c.b16 %v956, %v952
    %v1181 = vpack.c.b16 %v957, %v953
    %v1182 = vpack.c.b16 %v962, %v958
    %v1183 = vpack.c.b16 %v963, %v959
    %v1184 = vpack.c.b16 %v964, %v960
    %v1185 = vpack.c.b16 %v965, %v961
    %v1186 = vpack.c.b16 %v970, %v966
    %v1187 = vpack.c.b16 %v971, %v967
    %v1188 = vpack.c.b16 %v972, %v968
    %v1189 = vpack.c.b16 %v973, %v969
    %v1190 = vpack.c.b16 %v978, %v974
    %v1191 = vpack.c.b16 %v979, %v975
    %v1192 = vpack.c.b16 %v980, %v976
    %v1193 = vpack.c.b16 %v981, %v977
    %v1194 = vpack.c.b16 %v986, %v982
    %v1195 = vpack.c.b16 %v987, %v983
    %v1196 = vpack.c.b16 %v988, %v984
    %v1197 = vpack.c.b16 %v989, %v985
    %v1198 = vpack.c.b16 %v994, %v990
    %v1199 = vpack.c.b16 %v995, %v991
    %v1200 = vpack.c.b16 %v996, %v992
    %v1201 = vpack.c.b16 %v997, %v993
    %v1202 = vpack.c.b16 %v1002, %v998
    %v1203 = vpack.c.b16 %v1003, %v999
    %v1204 = vpack.c.b16 %v1004, %v1000
    %v1205 = vpack.c.b16 %v1005, %v1001
    %v1206 = vpack.c.b16 %v1010, %v1006
    %v1207 = vpack.c.b16 %v1011, %v1007
    %v1208 = vpack.c.b16 %v1012, %v1008
    %v1209 = vpack.c.b16 %v1013, %v1009
    %v1210 = vpack.c.b16 %v1018, %v1014
    %v1211 = vpack.c.b16 %v1019, %v1015
    %v1212 = vpack.c.b16 %v1020, %v1016
    %v1213 = vpack.c.b16 %v1021, %v1017
    %v1214 = vpack.c.b16 %v1026, %v1022
    %v1215 = vpack.c.b16 %v1027, %v1023
    %v1216 = vpack.c.b16 %v1028, %v1024
    %v1217 = vpack.c.b16 %v1029, %v1025
    %v1218 = vpack.c.b16 %v1034, %v1030
    %v1219 = vpack.c.b16 %v1035, %v1031
    %v1220 = vpack.c.b16 %v1036, %v1032
    %v1221 = vpack.c.b16 %v1037, %v1033
    %v1222 = vpack.c.b16 %v1042, %v1038
    %v1223 = vpack.c.b16 %v1043, %v1039
    %v1224 = vpack.c.b16 %v1044, %v1040
    %v1225 = vpack.c.b16 %v1045, %v1041
    %v1226 = vpack.c.b16 %v1050, %v1046
    %v1227 = vpack.c.b16 %v1051, %v1047
    %v1228 = vpack.c.b16 %v1052, %v1048
    %v1229 = vpack.c.b16 %v1053, %v1049
    %v1230 = vpack.c.b16 %v1058, %v1054
    %v1231 = vpack.c.b16 %v1059, %v1055
    %v1232 = vpack.c.b16 %v1060, %v1056
    %v1233 = vpack.c.b16 %v1061, %v1057
    %v1234 = vpack.c.b16 %v1066, %v1062
    %v1235 = vpack.c.b16 %v1067, %v1063
    %v1236 = vpack.c.b16 %v1068, %v1064
    %v1237 = vpack.c.b16 %v1069, %v1065
    %v1238 = vpack.c.b16 %v1074, %v1070
    %v1239 = vpack.c.b16 %v1075, %v1071
    %v1240 = vpack.c.b16 %v1076, %v1072
    %v1241 = vpack.c.b16 %v1077, %v1073
    %v1242 = vpack.c.b16 %v1082, %v1078
    %v1243 = vpack.c.b16 %v1083, %v1079
    %v1244 = vpack.c.b16 %v1084, %v1080
    %v1245 = vpack.c.b16 %v1085, %v1081
    %v1246 = vpack.c.b16 %v1090, %v1086
    %v1247 = vpack.c.b16 %v1091, %v1087
    %v1248 = vpack.c.b16 %v1092, %v1088
    %v1249 = vpack.c.b16 %v1093, %v1089
    %v1250 = vpack.c.b16 %v1098, %v1094
    %v1251 = vpack.c.b16 %v1099, %v1095
    %v1252 = vpack.c.b16 %v1100, %v1096
    %v1253 = vpack.c.b16 %v1101, %v1097
    %v1254 = vpack.c.b16 %v1106, %v1102
    %v1255 = vpack.c.b16 %v1107, %v1103
    %v1256 = vpack.c.b16 %v1108, %v1104
    %v1257 = vpack.c.b16 %v1109, %v1105
    %v1258 = vpack.c.b16 %v1114, %v1110
    %v1259 = vpack.c.b16 %v1115, %v1111
    %v1260 = vpack.c.b16 %v1116, %v1112
    %v1261 = vpack.c.b16 %v1117, %v1113
    %v1262 = vpack.c.b16 %v1122, %v1118
    %v1263 = vpack.c.b16 %v1123, %v1119
    %v1264 = vpack.c.b16 %v1124, %v1120
    %v1265 = vpack.c.b16 %v1125, %v1121
    %v1266 = vpack.c.b16 %v1130, %v1126
    %v1267 = vpack.c.b16 %v1131, %v1127
    %v1268 = vpack.c.b16 %v1132, %v1128
    %v1269 = vpack.c.b16 %v1133, %v1129
    %v1270 = vpack.c.b16 %v1138, %v1134
    %v1271 = vpack.c.b16 %v1139, %v1135
    %v1272 = vpack.c.b16 %v1140, %v1136
    %v1273 = vpack.c.b16 %v1141, %v1137
    %v1274 = vpack.c.b16 %v1146, %v1142
    %v1275 = vpack.c.b16 %v1147, %v1143
    %v1276 = vpack.c.b16 %v1148, %v1144
    %v1277 = vpack.c.b16 %v1149, %v1145
    %1406 = vmatpush.bf16.msra.mxu0 %v1178
    %1407 = vmatpush.bf16.msra.mxu0 %v1174
    %1408 = vmatpush.bf16.msra.mxu0 %v1170
    %1409 = vmatpush.bf16.msra.mxu0 %v1166
    %1410 = vmatpush.bf16.msra.mxu0 %v1162
    %1411 = vmatpush.bf16.msra.mxu0 %v1158
    %1412 = vmatpush.bf16.msra.mxu0 %v1154
    %1413 = vmatpush.bf16.msra.mxu0 %v1150
    %1414 = vmatmul.bf16.gmra.mxu0 %v624
    %v1415 = vpop.f32.mrf.mxu0
    %v1416 = vadd.f32 %v758, %v1415
    %v1417 = vpop.f32.mrf.mxu0
    %1418 = vdwg.mxu0
    %1419 = vmatpush.bf16.msra.mxu0 %v1210
    %1420 = vmatpush.bf16.msra.mxu0 %v1206
    %1421 = vmatpush.bf16.msra.mxu0 %v1202
    %1422 = vmatpush.bf16.msra.mxu0 %v1198
    %1423 = vmatpush.bf16.msra.mxu0 %v1194
    %1424 = vmatpush.bf16.msra.mxu0 %v1190
    %1425 = vmatpush.bf16.msra.mxu0 %v1186
    %1426 = vmatpush.bf16.msra.mxu0 %v1182
    %1427 = vmatmul.bf16.gmra.mxu0 %v625
    %v1428 = vpop.f32.mrf.mxu0
    %v1429 = vadd.f32 %v1416, %v1428
    %v1430 = vpop.f32.mrf.mxu0
    %1431 = vdwg.mxu0
    %1432 = vmatpush.bf16.msra.mxu0 %v1242
    %1433 = vmatpush.bf16.msra.mxu0 %v1238
    %1434 = vmatpush.bf16.msra.mxu0 %v1234
    %1435 = vmatpush.bf16.msra.mxu0 %v1230
    %1436 = vmatpush.bf16.msra.mxu0 %v1226
    %1437 = vmatpush.bf16.msra.mxu0 %v1222
    %1438 = vmatpush.bf16.msra.mxu0 %v1218
    %1439 = vmatpush.bf16.msra.mxu0 %v1214
    %1440 = vmatmul.bf16.gmra.mxu0 %v626
    %v1441 = vpop.f32.mrf.mxu0
    %v1442 = vadd.f32 %v1429, %v1441
    %v1443 = vpop.f32.mrf.mxu0
    %1444 = vdwg.mxu0
    %1445 = vmatpush.bf16.msra.mxu0 %v1274
    %1446 = vmatpush.bf16.msra.mxu0 %v1270
    %1447 = vmatpush.bf16.msra.mxu0 %v1266
    %1448 = vmatpush.bf16.msra.mxu0 %v1262
    %1449 = vmatpush.bf16.msra.mxu0 %v1258
    %1450 = vmatpush.bf16.msra.mxu0 %v1254
    %1451 = vmatpush.bf16.msra.mxu0 %v1250
    %1452 = vmatpush.bf16.msra.mxu0 %v1246
    %1453 = vmatmul.bf16.gmra.mxu0 %v627
    %v1454 = vpop.f32.mrf.mxu0
    %v1455 = vadd.f32 %v1442, %v1454
    %v1456 = vpop.f32.mrf.mxu0
    %1457 = vdwg.mxu0
    %1458 = vmatpush.bf16.msra.mxu0 %v1179
    %1459 = vmatpush.bf16.msra.mxu0 %v1175
    %1460 = vmatpush.bf16.msra.mxu0 %v1171
    %1461 = vmatpush.bf16.msra.mxu0 %v1167
    %1462 = vmatpush.bf16.msra.mxu0 %v1163
    %1463 = vmatpush.bf16.msra.mxu0 %v1159
    %1464 = vmatpush.bf16.msra.mxu0 %v1155
    %1465 = vmatpush.bf16.msra.mxu0 %v1151
    %1466 = vmatmul.bf16.gmra.mxu0 %v624
    %v1467 = vpop.f32.mrf.mxu0
    %v1468 = vadd.f32 %v759, %v1467
    %v1469 = vpop.f32.mrf.mxu0
    %1470 = vdwg.mxu0
    %1471 = vmatpush.bf16.msra.mxu0 %v1211
    %1472 = vmatpush.bf16.msra.mxu0 %v1207
    %1473 = vmatpush.bf16.msra.mxu0 %v1203
    %1474 = vmatpush.bf16.msra.mxu0 %v1199
    %1475 = vmatpush.bf16.msra.mxu0 %v1195
    %1476 = vmatpush.bf16.msra.mxu0 %v1191
    %1477 = vmatpush.bf16.msra.mxu0 %v1187
    %1478 = vmatpush.bf16.msra.mxu0 %v1183
    %1479 = vmatmul.bf16.gmra.mxu0 %v625
    %v1480 = vpop.f32.mrf.mxu0
    %v1481 = vadd.f32 %v1468, %v1480
    %v1482 = vpop.f32.mrf.mxu0
    %1483 = vdwg.mxu0
    %1484 = vmatpush.bf16.msra.mxu0 %v1243
    %1485 = vmatpush.bf16.msra.mxu0 %v1239
    %1486 = vmatpush.bf16.msra.mxu0 %v1235
    %1487 = vmatpush.bf16.msra.mxu0 %v1231
    %1488 = vmatpush.bf16.msra.mxu0 %v1227
    %1489 = vmatpush.bf16.msra.mxu0 %v1223
    %1490 = vmatpush.bf16.msra.mxu0 %v1219
    %1491 = vmatpush.bf16.msra.mxu0 %v1215
    %1492 = vmatmul.bf16.gmra.mxu0 %v626
    %v1493 = vpop.f32.mrf.mxu0
    %v1494 = vadd.f32 %v1481, %v1493
    %v1495 = vpop.f32.mrf.mxu0
    %1496 = vdwg.mxu0
    %1497 = vmatpush.bf16.msra.mxu0 %v1275
    %1498 = vmatpush.bf16.msra.mxu0 %v1271
    %1499 = vmatpush.bf16.msra.mxu0 %v1267
    %1500 = vmatpush.bf16.msra.mxu0 %v1263
    %1501 = vmatpush.bf16.msra.mxu0 %v1259
    %1502 = vmatpush.bf16.msra.mxu0 %v1255
    %1503 = vmatpush.bf16.msra.mxu0 %v1251
    %1504 = vmatpush.bf16.msra.mxu0 %v1247
    %1505 = vmatmul.bf16.gmra.mxu0 %v627
    %v1506 = vpop.f32.mrf.mxu0
    %v1507 = vadd.f32 %v1494, %v1506
    %v1508 = vpop.f32.mrf.mxu0
    %1509 = vdwg.mxu0
    %1510 = vmatpush.bf16.msra.mxu0 %v1180
    %1511 = vmatpush.bf16.msra.mxu0 %v1176
    %1512 = vmatpush.bf16.msra.mxu0 %v1172
    %1513 = vmatpush.bf16.msra.mxu0 %v1168
    %1514 = vmatpush.bf16.msra.mxu0 %v1164
    %1515 = vmatpush.bf16.msra.mxu0 %v1160
    %1516 = vmatpush.bf16.msra.mxu0 %v1156
    %1517 = vmatpush.bf16.msra.mxu0 %v1152
    %1518 = vmatmul.bf16.gmra.mxu0 %v624
    %v1519 = vpop.f32.mrf.mxu0
    %v1520 = vadd.f32 %v760, %v1519
    %v1521 = vpop.f32.mrf.mxu0
    %1522 = vdwg.mxu0
    %1523 = vmatpush.bf16.msra.mxu0 %v1212
    %1524 = vmatpush.bf16.msra.mxu0 %v1208
    %1525 = vmatpush.bf16.msra.mxu0 %v1204
    %1526 = vmatpush.bf16.msra.mxu0 %v1200
    %1527 = vmatpush.bf16.msra.mxu0 %v1196
    %1528 = vmatpush.bf16.msra.mxu0 %v1192
    %1529 = vmatpush.bf16.msra.mxu0 %v1188
    %1530 = vmatpush.bf16.msra.mxu0 %v1184
    %1531 = vmatmul.bf16.gmra.mxu0 %v625
    %v1532 = vpop.f32.mrf.mxu0
    %v1533 = vadd.f32 %v1520, %v1532
    %v1534 = vpop.f32.mrf.mxu0
    %1535 = vdwg.mxu0
    %1536 = vmatpush.bf16.msra.mxu0 %v1244
    %1537 = vmatpush.bf16.msra.mxu0 %v1240
    %1538 = vmatpush.bf16.msra.mxu0 %v1236
    %1539 = vmatpush.bf16.msra.mxu0 %v1232
    %1540 = vmatpush.bf16.msra.mxu0 %v1228
    %1541 = vmatpush.bf16.msra.mxu0 %v1224
    %1542 = vmatpush.bf16.msra.mxu0 %v1220
    %1543 = vmatpush.bf16.msra.mxu0 %v1216
    %1544 = vmatmul.bf16.gmra.mxu0 %v626
    %v1545 = vpop.f32.mrf.mxu0
    %v1546 = vadd.f32 %v1533, %v1545
    %v1547 = vpop.f32.mrf.mxu0
    %1548 = vdwg.mxu0
    %1549 = vmatpush.bf16.msra.mxu0 %v1276
    %1550 = vmatpush.bf16.msra.mxu0 %v1272
    %1551 = vmatpush.bf16.msra.mxu0 %v1268
    %1552 = vmatpush.bf16.msra.mxu0 %v1264
    %1553 = vmatpush.bf16.msra.mxu0 %v1260
    %1554 = vmatpush.bf16.msra.mxu0 %v1256
    %1555 = vmatpush.bf16.msra.mxu0 %v1252
    %1556 = vmatpush.bf16.msra.mxu0 %v1248
    %1557 = vmatmul.bf16.gmra.mxu0 %v627
    %v1558 = vpop.f32.mrf.mxu0
    %v1559 = vadd.f32 %v1546, %v1558
    %v1560 = vpop.f32.mrf.mxu0
    %1561 = vdwg.mxu0
    %1562 = vmatpush.bf16.msra.mxu0 %v1181
    %1563 = vmatpush.bf16.msra.mxu0 %v1177
    %1564 = vmatpush.bf16.msra.mxu0 %v1173
    %1565 = vmatpush.bf16.msra.mxu0 %v1169
    %1566 = vmatpush.bf16.msra.mxu0 %v1165
    %1567 = vmatpush.bf16.msra.mxu0 %v1161
    %1568 = vmatpush.bf16.msra.mxu0 %v1157
    %1569 = vmatpush.bf16.msra.mxu0 %v1153
    %1570 = vmatmul.bf16.gmra.mxu0 %v624
    %v1571 = vpop.f32.mrf.mxu0
    %v1572 = vadd.f32 %v761, %v1571
    %v1573 = vpop.f32.mrf.mxu0
    %1574 = vdwg.mxu0
    %1575 = vmatpush.bf16.msra.mxu0 %v1213
    %1576 = vmatpush.bf16.msra.mxu0 %v1209
    %1577 = vmatpush.bf16.msra.mxu0 %v1205
    %1578 = vmatpush.bf16.msra.mxu0 %v1201
    %1579 = vmatpush.bf16.msra.mxu0 %v1197
    %1580 = vmatpush.bf16.msra.mxu0 %v1193
    %1581 = vmatpush.bf16.msra.mxu0 %v1189
    %1582 = vmatpush.bf16.msra.mxu0 %v1185
    %1583 = vmatmul.bf16.gmra.mxu0 %v625
    %v1584 = vpop.f32.mrf.mxu0
    %v1585 = vadd.f32 %v1572, %v1584
    %v1586 = vpop.f32.mrf.mxu0
    %1587 = vdwg.mxu0
    %1588 = vmatpush.bf16.msra.mxu0 %v1245
    %1589 = vmatpush.bf16.msra.mxu0 %v1241
    %1590 = vmatpush.bf16.msra.mxu0 %v1237
    %1591 = vmatpush.bf16.msra.mxu0 %v1233
    %1592 = vmatpush.bf16.msra.mxu0 %v1229
    %1593 = vmatpush.bf16.msra.mxu0 %v1225
    %1594 = vmatpush.bf16.msra.mxu0 %v1221
    %1595 = vmatpush.bf16.msra.mxu0 %v1217
    %1596 = vmatmul.bf16.gmra.mxu0 %v626
    %v1597 = vpop.f32.mrf.mxu0
    %v1598 = vadd.f32 %v1585, %v1597
    %v1599 = vpop.f32.mrf.mxu0
    %1600 = vdwg.mxu0
    %1601 = vmatpush.bf16.msra.mxu0 %v1277
    %1602 = vmatpush.bf16.msra.mxu0 %v1273
    %1603 = vmatpush.bf16.msra.mxu0 %v1269
    %1604 = vmatpush.bf16.msra.mxu0 %v1265
    %1605 = vmatpush.bf16.msra.mxu0 %v1261
    %1606 = vmatpush.bf16.msra.mxu0 %v1257
    %1607 = vmatpush.bf16.msra.mxu0 %v1253
    %1608 = vmatpush.bf16.msra.mxu0 %v1249
    %1609 = vmatmul.bf16.gmra.mxu0 %v627
    %v1610 = vpop.f32.mrf.mxu0
    %v1611 = vadd.f32 %v1598, %v1610
    %v1612 = vpop.f32.mrf.mxu0
    %1613 = vdwg.mxu0
    %v1614 = vmax.f32 %v1455, 0.0
    %v1615 = vmax.f32 %v1507, 0.0
    %v1616 = vmax.f32 %v1559, 0.0
    %v1617 = vmax.f32 %v1611, 0.0
    %v1618 = vpack.c.bf16 %v1614, %v1614
    %v1619 = vpack.c.bf16 %v1615, %v1615
    %v1620 = vpack.c.bf16 %v1616, %v1616
    %v1621 = vpack.c.bf16 %v1617, %v1617
    %v1622 = vld [vmem:[#allocation11] sm:$0xff]
    %v1623 = vld [vmem:[#allocation11 + $0x8] sm:$0xff]
    %v1624 = vld [vmem:[#allocation11 + $0x10] sm:$0xff]
    %v1625 = vld [vmem:[#allocation11 + $0x18] sm:$0xff]
    %v1626 = vld [vmem:[#allocation11 + $0x20] sm:$0xff]
    %v1627 = vld [vmem:[#allocation11 + $0x28] sm:$0xff]
    %v1628 = vld [vmem:[#allocation11 + $0x30] sm:$0xff]
    %v1629 = vld [vmem:[#allocation11 + $0x38] sm:$0xff]
    %v1630 = vld [vmem:[#allocation11 + $0x40] sm:$0xff]
    %v1631 = vld [vmem:[#allocation11 + $0x48] sm:$0xff]
    %v1632 = vld [vmem:[#allocation11 + $0x50] sm:$0xff]
    %v1633 = vld [vmem:[#allocation11 + $0x58] sm:$0xff]
    %v1634 = vld [vmem:[#allocation11 + $0x60] sm:$0xff]
    %v1635 = vld [vmem:[#allocation11 + $0x68] sm:$0xff]
    %v1636 = vld [vmem:[#allocation11 + $0x70] sm:$0xff]
    %v1637 = vld [vmem:[#allocation11 + $0x78] sm:$0xff]
    %v1638 = vld [vmem:[#allocation11 + $0x80] sm:$0xff]
    %v1639 = vld [vmem:[#allocation11 + $0x88] sm:$0xff]
    %v1640 = vld [vmem:[#allocation11 + $0x90] sm:$0xff]
    %v1641 = vld [vmem:[#allocation11 + $0x98] sm:$0xff]
    %v1642 = vld [vmem:[#allocation11 + $0xa0] sm:$0xff]
    %v1643 = vld [vmem:[#allocation11 + $0xa8] sm:$0xff]
    %v1644 = vld [vmem:[#allocation11 + $0xb0] sm:$0xff]
    %v1645 = vld [vmem:[#allocation11 + $0xb8] sm:$0xff]
    %v1646 = vld [vmem:[#allocation11 + $0xc0] sm:$0xff]
    %v1647 = vld [vmem:[#allocation11 + $0xc8] sm:$0xff]
    %v1648 = vld [vmem:[#allocation11 + $0xd0] sm:$0xff]
    %v1649 = vld [vmem:[#allocation11 + $0xd8] sm:$0xff]
    %v1650 = vld [vmem:[#allocation11 + $0xe0] sm:$0xff]
    %v1651 = vld [vmem:[#allocation11 + $0xe8] sm:$0xff]
    %v1652 = vld [vmem:[#allocation11 + $0xf0] sm:$0xff]
    %v1653 = vld [vmem:[#allocation11 + $0xf8] sm:$0xff]
    %v1654 = vld [vmem:[#allocation11 + $0x100] sm:$0xff]
    %v1655 = vld [vmem:[#allocation11 + $0x108] sm:$0xff]
    %v1656 = vld [vmem:[#allocation11 + $0x110] sm:$0xff]
    %v1657 = vld [vmem:[#allocation11 + $0x118] sm:$0xff]
    %v1658 = vld [vmem:[#allocation11 + $0x120] sm:$0xff]
    %v1659 = vld [vmem:[#allocation11 + $0x128] sm:$0xff]
    %v1660 = vld [vmem:[#allocation11 + $0x130] sm:$0xff]
    %v1661 = vld [vmem:[#allocation11 + $0x138] sm:$0xff]
    %v1662 = vld [vmem:[#allocation11 + $0x140] sm:$0xff]
    %v1663 = vld [vmem:[#allocation11 + $0x148] sm:$0xff]
    %v1664 = vld [vmem:[#allocation11 + $0x150] sm:$0xff]
    %v1665 = vld [vmem:[#allocation11 + $0x158] sm:$0xff]
    %v1666 = vld [vmem:[#allocation11 + $0x160] sm:$0xff]
    %v1667 = vld [vmem:[#allocation11 + $0x168] sm:$0xff]
    %v1668 = vld [vmem:[#allocation11 + $0x170] sm:$0xff]
    %v1669 = vld [vmem:[#allocation11 + $0x178] sm:$0xff]
    %v1670 = vld [vmem:[#allocation11 + $0x180] sm:$0xff]
    %v1671 = vld [vmem:[#allocation11 + $0x188] sm:$0xff]
    %v1672 = vld [vmem:[#allocation11 + $0x190] sm:$0xff]
    %v1673 = vld [vmem:[#allocation11 + $0x198] sm:$0xff]
    %v1674 = vld [vmem:[#allocation11 + $0x1a0] sm:$0xff]
    %v1675 = vld [vmem:[#allocation11 + $0x1a8] sm:$0xff]
    %v1676 = vld [vmem:[#allocation11 + $0x1b0] sm:$0xff]
    %v1677 = vld [vmem:[#allocation11 + $0x1b8] sm:$0xff]
    %v1678 = vld [vmem:[#allocation11 + $0x1c0] sm:$0xff]
    %v1679 = vld [vmem:[#allocation11 + $0x1c8] sm:$0xff]
    %v1680 = vld [vmem:[#allocation11 + $0x1d0] sm:$0xff]
    %v1681 = vld [vmem:[#allocation11 + $0x1d8] sm:$0xff]
    %v1682 = vld [vmem:[#allocation11 + $0x1e0] sm:$0xff]
    %v1683 = vld [vmem:[#allocation11 + $0x1e8] sm:$0xff]
    %v1684 = vld [vmem:[#allocation11 + $0x1f0] sm:$0xff]
    %v1685 = vld [vmem:[#allocation11 + $0x1f8] sm:$0xff]
    %v1686 = vld [vmem:[#allocation11 + $0x200] sm:$0xff]
    %v1687 = vld [vmem:[#allocation11 + $0x208] sm:$0xff]
    %v1688 = vld [vmem:[#allocation11 + $0x210] sm:$0xff]
    %v1689 = vld [vmem:[#allocation11 + $0x218] sm:$0xff]
    %v1690 = vld [vmem:[#allocation11 + $0x220] sm:$0xff]
    %v1691 = vld [vmem:[#allocation11 + $0x228] sm:$0xff]
    %v1692 = vld [vmem:[#allocation11 + $0x230] sm:$0xff]
    %v1693 = vld [vmem:[#allocation11 + $0x238] sm:$0xff]
    %v1694 = vld [vmem:[#allocation11 + $0x240] sm:$0xff]
    %v1695 = vld [vmem:[#allocation11 + $0x248] sm:$0xff]
    %v1696 = vld [vmem:[#allocation11 + $0x250] sm:$0xff]
    %v1697 = vld [vmem:[#allocation11 + $0x258] sm:$0xff]
    %v1698 = vld [vmem:[#allocation11 + $0x260] sm:$0xff]
    %v1699 = vld [vmem:[#allocation11 + $0x268] sm:$0xff]
    %v1700 = vld [vmem:[#allocation11 + $0x270] sm:$0xff]
    %v1701 = vld [vmem:[#allocation11 + $0x278] sm:$0xff]
    %v1702 = vld [vmem:[#allocation11 + $0x280] sm:$0xff]
    %v1703 = vld [vmem:[#allocation11 + $0x288] sm:$0xff]
    %v1704 = vld [vmem:[#allocation11 + $0x290] sm:$0xff]
    %v1705 = vld [vmem:[#allocation11 + $0x298] sm:$0xff]
    %v1706 = vld [vmem:[#allocation11 + $0x2a0] sm:$0xff]
    %v1707 = vld [vmem:[#allocation11 + $0x2a8] sm:$0xff]
    %v1708 = vld [vmem:[#allocation11 + $0x2b0] sm:$0xff]
    %v1709 = vld [vmem:[#allocation11 + $0x2b8] sm:$0xff]
    %v1710 = vld [vmem:[#allocation11 + $0x2c0] sm:$0xff]
    %v1711 = vld [vmem:[#allocation11 + $0x2c8] sm:$0xff]
    %v1712 = vld [vmem:[#allocation11 + $0x2d0] sm:$0xff]
    %v1713 = vld [vmem:[#allocation11 + $0x2d8] sm:$0xff]
    %v1714 = vld [vmem:[#allocation11 + $0x2e0] sm:$0xff]
    %v1715 = vld [vmem:[#allocation11 + $0x2e8] sm:$0xff]
    %v1716 = vld [vmem:[#allocation11 + $0x2f0] sm:$0xff]
    %v1717 = vld [vmem:[#allocation11 + $0x2f8] sm:$0xff]
    %v1718 = vld [vmem:[#allocation11 + $0x300] sm:$0xff]
    %v1719 = vld [vmem:[#allocation11 + $0x308] sm:$0xff]
    %v1720 = vld [vmem:[#allocation11 + $0x310] sm:$0xff]
    %v1721 = vld [vmem:[#allocation11 + $0x318] sm:$0xff]
    %v1722 = vld [vmem:[#allocation11 + $0x320] sm:$0xff]
    %v1723 = vld [vmem:[#allocation11 + $0x328] sm:$0xff]
    %v1724 = vld [vmem:[#allocation11 + $0x330] sm:$0xff]
    %v1725 = vld [vmem:[#allocation11 + $0x338] sm:$0xff]
    %v1726 = vld [vmem:[#allocation11 + $0x340] sm:$0xff]
    %v1727 = vld [vmem:[#allocation11 + $0x348] sm:$0xff]
    %v1728 = vld [vmem:[#allocation11 + $0x350] sm:$0xff]
    %v1729 = vld [vmem:[#allocation11 + $0x358] sm:$0xff]
    %v1730 = vld [vmem:[#allocation11 + $0x360] sm:$0xff]
    %v1731 = vld [vmem:[#allocation11 + $0x368] sm:$0xff]
    %v1732 = vld [vmem:[#allocation11 + $0x370] sm:$0xff]
    %v1733 = vld [vmem:[#allocation11 + $0x378] sm:$0xff]
    %v1734 = vld [vmem:[#allocation11 + $0x380] sm:$0xff]
    %v1735 = vld [vmem:[#allocation11 + $0x388] sm:$0xff]
    %v1736 = vld [vmem:[#allocation11 + $0x390] sm:$0xff]
    %v1737 = vld [vmem:[#allocation11 + $0x398] sm:$0xff]
    %v1738 = vld [vmem:[#allocation11 + $0x3a0] sm:$0xff]
    %v1739 = vld [vmem:[#allocation11 + $0x3a8] sm:$0xff]
    %v1740 = vld [vmem:[#allocation11 + $0x3b0] sm:$0xff]
    %v1741 = vld [vmem:[#allocation11 + $0x3b8] sm:$0xff]
    %v1742 = vld [vmem:[#allocation11 + $0x3c0] sm:$0xff]
    %v1743 = vld [vmem:[#allocation11 + $0x3c8] sm:$0xff]
    %v1744 = vld [vmem:[#allocation11 + $0x3d0] sm:$0xff]
    %v1745 = vld [vmem:[#allocation11 + $0x3d8] sm:$0xff]
    %v1746 = vld [vmem:[#allocation11 + $0x3e0] sm:$0xff]
    %v1747 = vld [vmem:[#allocation11 + $0x3e8] sm:$0xff]
    %v1748 = vld [vmem:[#allocation11 + $0x3f0] sm:$0xff]
    %v1749 = vld [vmem:[#allocation11 + $0x3f8] sm:$0xff]
    %v1750 = vld [vmem:[%s6] sm:$0xf]
    %v1752 = vperm.slane %v1750, 0
    %v1753 = vperm.slane %v1750, 1
    %v1754 = vperm.slane %v1750, 2
    %v1755 = vperm.slane %v1750, 3
    %v1888 = vunpack.c.l.b16 %v1622
    %v1889 = vunpack.c.h.b16 %v1622
    %v1890 = vunpack.c.l.b16 %v1623
    %v1891 = vunpack.c.h.b16 %v1623
    %v1892 = vunpack.c.l.b16 %v1624
    %v1893 = vunpack.c.h.b16 %v1624
    %v1894 = vunpack.c.l.b16 %v1625
    %v1895 = vunpack.c.h.b16 %v1625
    %v1896 = vunpack.c.l.b16 %v1626
    %v1897 = vunpack.c.h.b16 %v1626
    %v1898 = vunpack.c.l.b16 %v1627
    %v1899 = vunpack.c.h.b16 %v1627
    %v1900 = vunpack.c.l.b16 %v1628
    %v1901 = vunpack.c.h.b16 %v1628
    %v1902 = vunpack.c.l.b16 %v1629
    %v1903 = vunpack.c.h.b16 %v1629
    %v1904 = vunpack.c.l.b16 %v1630
    %v1905 = vunpack.c.h.b16 %v1630
    %v1906 = vunpack.c.l.b16 %v1631
    %v1907 = vunpack.c.h.b16 %v1631
    %v1908 = vunpack.c.l.b16 %v1632
    %v1909 = vunpack.c.h.b16 %v1632
    %v1910 = vunpack.c.l.b16 %v1633
    %v1911 = vunpack.c.h.b16 %v1633
    %v1912 = vunpack.c.l.b16 %v1634
    %v1913 = vunpack.c.h.b16 %v1634
    %v1914 = vunpack.c.l.b16 %v1635
    %v1915 = vunpack.c.h.b16 %v1635
    %v1916 = vunpack.c.l.b16 %v1636
    %v1917 = vunpack.c.h.b16 %v1636
    %v1918 = vunpack.c.l.b16 %v1637
    %v1919 = vunpack.c.h.b16 %v1637
    %v1920 = vunpack.c.l.b16 %v1638
    %v1921 = vunpack.c.h.b16 %v1638
    %v1922 = vunpack.c.l.b16 %v1639
    %v1923 = vunpack.c.h.b16 %v1639
    %v1924 = vunpack.c.l.b16 %v1640
    %v1925 = vunpack.c.h.b16 %v1640
    %v1926 = vunpack.c.l.b16 %v1641
    %v1927 = vunpack.c.h.b16 %v1641
    %v1928 = vunpack.c.l.b16 %v1642
    %v1929 = vunpack.c.h.b16 %v1642
    %v1930 = vunpack.c.l.b16 %v1643
    %v1931 = vunpack.c.h.b16 %v1643
    %v1932 = vunpack.c.l.b16 %v1644
    %v1933 = vunpack.c.h.b16 %v1644
    %v1934 = vunpack.c.l.b16 %v1645
    %v1935 = vunpack.c.h.b16 %v1645
    %v1936 = vunpack.c.l.b16 %v1646
    %v1937 = vunpack.c.h.b16 %v1646
    %v1938 = vunpack.c.l.b16 %v1647
    %v1939 = vunpack.c.h.b16 %v1647
    %v1940 = vunpack.c.l.b16 %v1648
    %v1941 = vunpack.c.h.b16 %v1648
    %v1942 = vunpack.c.l.b16 %v1649
    %v1943 = vunpack.c.h.b16 %v1649
    %v1944 = vunpack.c.l.b16 %v1650
    %v1945 = vunpack.c.h.b16 %v1650
    %v1946 = vunpack.c.l.b16 %v1651
    %v1947 = vunpack.c.h.b16 %v1651
    %v1948 = vunpack.c.l.b16 %v1652
    %v1949 = vunpack.c.h.b16 %v1652
    %v1950 = vunpack.c.l.b16 %v1653
    %v1951 = vunpack.c.h.b16 %v1653
    %v1952 = vunpack.c.l.b16 %v1654
    %v1953 = vunpack.c.h.b16 %v1654
    %v1954 = vunpack.c.l.b16 %v1655
    %v1955 = vunpack.c.h.b16 %v1655
    %v1956 = vunpack.c.l.b16 %v1656
    %v1957 = vunpack.c.h.b16 %v1656
    %v1958 = vunpack.c.l.b16 %v1657
    %v1959 = vunpack.c.h.b16 %v1657
    %v1960 = vunpack.c.l.b16 %v1658
    %v1961 = vunpack.c.h.b16 %v1658
    %v1962 = vunpack.c.l.b16 %v1659
    %v1963 = vunpack.c.h.b16 %v1659
    %v1964 = vunpack.c.l.b16 %v1660
    %v1965 = vunpack.c.h.b16 %v1660
    %v1966 = vunpack.c.l.b16 %v1661
    %v1967 = vunpack.c.h.b16 %v1661
    %v1968 = vunpack.c.l.b16 %v1662
    %v1969 = vunpack.c.h.b16 %v1662
    %v1970 = vunpack.c.l.b16 %v1663
    %v1971 = vunpack.c.h.b16 %v1663
    %v1972 = vunpack.c.l.b16 %v1664
    %v1973 = vunpack.c.h.b16 %v1664
    %v1974 = vunpack.c.l.b16 %v1665
    %v1975 = vunpack.c.h.b16 %v1665
    %v1976 = vunpack.c.l.b16 %v1666
    %v1977 = vunpack.c.h.b16 %v1666
    %v1978 = vunpack.c.l.b16 %v1667
    %v1979 = vunpack.c.h.b16 %v1667
    %v1980 = vunpack.c.l.b16 %v1668
    %v1981 = vunpack.c.h.b16 %v1668
    %v1982 = vunpack.c.l.b16 %v1669
    %v1983 = vunpack.c.h.b16 %v1669
    %v1984 = vunpack.c.l.b16 %v1670
    %v1985 = vunpack.c.h.b16 %v1670
    %v1986 = vunpack.c.l.b16 %v1671
    %v1987 = vunpack.c.h.b16 %v1671
    %v1988 = vunpack.c.l.b16 %v1672
    %v1989 = vunpack.c.h.b16 %v1672
    %v1990 = vunpack.c.l.b16 %v1673
    %v1991 = vunpack.c.h.b16 %v1673
    %v1992 = vunpack.c.l.b16 %v1674
    %v1993 = vunpack.c.h.b16 %v1674
    %v1994 = vunpack.c.l.b16 %v1675
    %v1995 = vunpack.c.h.b16 %v1675
    %v1996 = vunpack.c.l.b16 %v1676
    %v1997 = vunpack.c.h.b16 %v1676
    %v1998 = vunpack.c.l.b16 %v1677
    %v1999 = vunpack.c.h.b16 %v1677
    %v2000 = vunpack.c.l.b16 %v1678
    %v2001 = vunpack.c.h.b16 %v1678
    %v2002 = vunpack.c.l.b16 %v1679
    %v2003 = vunpack.c.h.b16 %v1679
    %v2004 = vunpack.c.l.b16 %v1680
    %v2005 = vunpack.c.h.b16 %v1680
    %v2006 = vunpack.c.l.b16 %v1681
    %v2007 = vunpack.c.h.b16 %v1681
    %v2008 = vunpack.c.l.b16 %v1682
    %v2009 = vunpack.c.h.b16 %v1682
    %v2010 = vunpack.c.l.b16 %v1683
    %v2011 = vunpack.c.h.b16 %v1683
    %v2012 = vunpack.c.l.b16 %v1684
    %v2013 = vunpack.c.h.b16 %v1684
    %v2014 = vunpack.c.l.b16 %v1685
    %v2015 = vunpack.c.h.b16 %v1685
    %v2016 = vunpack.c.l.b16 %v1686
    %v2017 = vunpack.c.h.b16 %v1686
    %v2018 = vunpack.c.l.b16 %v1687
    %v2019 = vunpack.c.h.b16 %v1687
    %v2020 = vunpack.c.l.b16 %v1688
    %v2021 = vunpack.c.h.b16 %v1688
    %v2022 = vunpack.c.l.b16 %v1689
    %v2023 = vunpack.c.h.b16 %v1689
    %v2024 = vunpack.c.l.b16 %v1690
    %v2025 = vunpack.c.h.b16 %v1690
    %v2026 = vunpack.c.l.b16 %v1691
    %v2027 = vunpack.c.h.b16 %v1691
    %v2028 = vunpack.c.l.b16 %v1692
    %v2029 = vunpack.c.h.b16 %v1692
    %v2030 = vunpack.c.l.b16 %v1693
    %v2031 = vunpack.c.h.b16 %v1693
    %v2032 = vunpack.c.l.b16 %v1694
    %v2033 = vunpack.c.h.b16 %v1694
    %v2034 = vunpack.c.l.b16 %v1695
    %v2035 = vunpack.c.h.b16 %v1695
    %v2036 = vunpack.c.l.b16 %v1696
    %v2037 = vunpack.c.h.b16 %v1696
    %v2038 = vunpack.c.l.b16 %v1697
    %v2039 = vunpack.c.h.b16 %v1697
    %v2040 = vunpack.c.l.b16 %v1698
    %v2041 = vunpack.c.h.b16 %v1698
    %v2042 = vunpack.c.l.b16 %v1699
    %v2043 = vunpack.c.h.b16 %v1699
    %v2044 = vunpack.c.l.b16 %v1700
    %v2045 = vunpack.c.h.b16 %v1700
    %v2046 = vunpack.c.l.b16 %v1701
    %v2047 = vunpack.c.h.b16 %v1701
    %v2048 = vunpack.c.l.b16 %v1702
    %v2049 = vunpack.c.h.b16 %v1702
    %v2050 = vunpack.c.l.b16 %v1703
    %v2051 = vunpack.c.h.b16 %v1703
    %v2052 = vunpack.c.l.b16 %v1704
    %v2053 = vunpack.c.h.b16 %v1704
    %v2054 = vunpack.c.l.b16 %v1705
    %v2055 = vunpack.c.h.b16 %v1705
    %v2056 = vunpack.c.l.b16 %v1706
    %v2057 = vunpack.c.h.b16 %v1706
    %v2058 = vunpack.c.l.b16 %v1707
    %v2059 = vunpack.c.h.b16 %v1707
    %v2060 = vunpack.c.l.b16 %v1708
    %v2061 = vunpack.c.h.b16 %v1708
    %v2062 = vunpack.c.l.b16 %v1709
    %v2063 = vunpack.c.h.b16 %v1709
    %v2064 = vunpack.c.l.b16 %v1710
    %v2065 = vunpack.c.h.b16 %v1710
    %v2066 = vunpack.c.l.b16 %v1711
    %v2067 = vunpack.c.h.b16 %v1711
    %v2068 = vunpack.c.l.b16 %v1712
    %v2069 = vunpack.c.h.b16 %v1712
    %v2070 = vunpack.c.l.b16 %v1713
    %v2071 = vunpack.c.h.b16 %v1713
    %v2072 = vunpack.c.l.b16 %v1714
    %v2073 = vunpack.c.h.b16 %v1714
    %v2074 = vunpack.c.l.b16 %v1715
    %v2075 = vunpack.c.h.b16 %v1715
    %v2076 = vunpack.c.l.b16 %v1716
    %v2077 = vunpack.c.h.b16 %v1716
    %v2078 = vunpack.c.l.b16 %v1717
    %v2079 = vunpack.c.h.b16 %v1717
    %v2080 = vunpack.c.l.b16 %v1718
    %v2081 = vunpack.c.h.b16 %v1718
    %v2082 = vunpack.c.l.b16 %v1719
    %v2083 = vunpack.c.h.b16 %v1719
    %v2084 = vunpack.c.l.b16 %v1720
    %v2085 = vunpack.c.h.b16 %v1720
    %v2086 = vunpack.c.l.b16 %v1721
    %v2087 = vunpack.c.h.b16 %v1721
    %v2088 = vunpack.c.l.b16 %v1722
    %v2089 = vunpack.c.h.b16 %v1722
    %v2090 = vunpack.c.l.b16 %v1723
    %v2091 = vunpack.c.h.b16 %v1723
    %v2092 = vunpack.c.l.b16 %v1724
    %v2093 = vunpack.c.h.b16 %v1724
    %v2094 = vunpack.c.l.b16 %v1725
    %v2095 = vunpack.c.h.b16 %v1725
    %v2096 = vunpack.c.l.b16 %v1726
    %v2097 = vunpack.c.h.b16 %v1726
    %v2098 = vunpack.c.l.b16 %v1727
    %v2099 = vunpack.c.h.b16 %v1727
    %v2100 = vunpack.c.l.b16 %v1728
    %v2101 = vunpack.c.h.b16 %v1728
    %v2102 = vunpack.c.l.b16 %v1729
    %v2103 = vunpack.c.h.b16 %v1729
    %v2104 = vunpack.c.l.b16 %v1730
    %v2105 = vunpack.c.h.b16 %v1730
    %v2106 = vunpack.c.l.b16 %v1731
    %v2107 = vunpack.c.h.b16 %v1731
    %v2108 = vunpack.c.l.b16 %v1732
    %v2109 = vunpack.c.h.b16 %v1732
    %v2110 = vunpack.c.l.b16 %v1733
    %v2111 = vunpack.c.h.b16 %v1733
    %v2112 = vunpack.c.l.b16 %v1734
    %v2113 = vunpack.c.h.b16 %v1734
    %v2114 = vunpack.c.l.b16 %v1735
    %v2115 = vunpack.c.h.b16 %v1735
    %v2116 = vunpack.c.l.b16 %v1736
    %v2117 = vunpack.c.h.b16 %v1736
    %v2118 = vunpack.c.l.b16 %v1737
    %v2119 = vunpack.c.h.b16 %v1737
    %v2120 = vunpack.c.l.b16 %v1738
    %v2121 = vunpack.c.h.b16 %v1738
    %v2122 = vunpack.c.l.b16 %v1739
    %v2123 = vunpack.c.h.b16 %v1739
    %v2124 = vunpack.c.l.b16 %v1740
    %v2125 = vunpack.c.h.b16 %v1740
    %v2126 = vunpack.c.l.b16 %v1741
    %v2127 = vunpack.c.h.b16 %v1741
    %v2128 = vunpack.c.l.b16 %v1742
    %v2129 = vunpack.c.h.b16 %v1742
    %v2130 = vunpack.c.l.b16 %v1743
    %v2131 = vunpack.c.h.b16 %v1743
    %v2132 = vunpack.c.l.b16 %v1744
    %v2133 = vunpack.c.h.b16 %v1744
    %v2134 = vunpack.c.l.b16 %v1745
    %v2135 = vunpack.c.h.b16 %v1745
    %v2136 = vunpack.c.l.b16 %v1746
    %v2137 = vunpack.c.h.b16 %v1746
    %v2138 = vunpack.c.l.b16 %v1747
    %v2139 = vunpack.c.h.b16 %v1747
    %v2140 = vunpack.c.l.b16 %v1748
    %v2141 = vunpack.c.h.b16 %v1748
    %v2142 = vunpack.c.l.b16 %v1749
    %v2143 = vunpack.c.h.b16 %v1749
    %v2144 = vpack.c.b16 %v1892, %v1888
    %v2145 = vpack.c.b16 %v1893, %v1889
    %v2146 = vpack.c.b16 %v1894, %v1890
    %v2147 = vpack.c.b16 %v1895, %v1891
    %v2148 = vpack.c.b16 %v1900, %v1896
    %v2149 = vpack.c.b16 %v1901, %v1897
    %v2150 = vpack.c.b16 %v1902, %v1898
    %v2151 = vpack.c.b16 %v1903, %v1899
    %v2152 = vpack.c.b16 %v1908, %v1904
    %v2153 = vpack.c.b16 %v1909, %v1905
    %v2154 = vpack.c.b16 %v1910, %v1906
    %v2155 = vpack.c.b16 %v1911, %v1907
    %v2156 = vpack.c.b16 %v1916, %v1912
    %v2157 = vpack.c.b16 %v1917, %v1913
    %v2158 = vpack.c.b16 %v1918, %v1914
    %v2159 = vpack.c.b16 %v1919, %v1915
    %v2160 = vpack.c.b16 %v1924, %v1920
    %v2161 = vpack.c.b16 %v1925, %v1921
    %v2162 = vpack.c.b16 %v1926, %v1922
    %v2163 = vpack.c.b16 %v1927, %v1923
    %v2164 = vpack.c.b16 %v1932, %v1928
    %v2165 = vpack.c.b16 %v1933, %v1929
    %v2166 = vpack.c.b16 %v1934, %v1930
    %v2167 = vpack.c.b16 %v1935, %v1931
    %v2168 = vpack.c.b16 %v1940, %v1936
    %v2169 = vpack.c.b16 %v1941, %v1937
    %v2170 = vpack.c.b16 %v1942, %v1938
    %v2171 = vpack.c.b16 %v1943, %v1939
    %v2172 = vpack.c.b16 %v1948, %v1944
    %v2173 = vpack.c.b16 %v1949, %v1945
    %v2174 = vpack.c.b16 %v1950, %v1946
    %v2175 = vpack.c.b16 %v1951, %v1947
    %v2176 = vpack.c.b16 %v1956, %v1952
    %v2177 = vpack.c.b16 %v1957, %v1953
    %v2178 = vpack.c.b16 %v1958, %v1954
    %v2179 = vpack.c.b16 %v1959, %v1955
    %v2180 = vpack.c.b16 %v1964, %v1960
    %v2181 = vpack.c.b16 %v1965, %v1961
    %v2182 = vpack.c.b16 %v1966, %v1962
    %v2183 = vpack.c.b16 %v1967, %v1963
    %v2184 = vpack.c.b16 %v1972, %v1968
    %v2185 = vpack.c.b16 %v1973, %v1969
    %v2186 = vpack.c.b16 %v1974, %v1970
    %v2187 = vpack.c.b16 %v1975, %v1971
    %v2188 = vpack.c.b16 %v1980, %v1976
    %v2189 = vpack.c.b16 %v1981, %v1977
    %v2190 = vpack.c.b16 %v1982, %v1978
    %v2191 = vpack.c.b16 %v1983, %v1979
    %v2192 = vpack.c.b16 %v1988, %v1984
    %v2193 = vpack.c.b16 %v1989, %v1985
    %v2194 = vpack.c.b16 %v1990, %v1986
    %v2195 = vpack.c.b16 %v1991, %v1987
    %v2196 = vpack.c.b16 %v1996, %v1992
    %v2197 = vpack.c.b16 %v1997, %v1993
    %v2198 = vpack.c.b16 %v1998, %v1994
    %v2199 = vpack.c.b16 %v1999, %v1995
    %v2200 = vpack.c.b16 %v2004, %v2000
    %v2201 = vpack.c.b16 %v2005, %v2001
    %v2202 = vpack.c.b16 %v2006, %v2002
    %v2203 = vpack.c.b16 %v2007, %v2003
    %v2204 = vpack.c.b16 %v2012, %v2008
    %v2205 = vpack.c.b16 %v2013, %v2009
    %v2206 = vpack.c.b16 %v2014, %v2010
    %v2207 = vpack.c.b16 %v2015, %v2011
    %v2208 = vpack.c.b16 %v2020, %v2016
    %v2209 = vpack.c.b16 %v2021, %v2017
    %v2210 = vpack.c.b16 %v2022, %v2018
    %v2211 = vpack.c.b16 %v2023, %v2019
    %v2212 = vpack.c.b16 %v2028, %v2024
    %v2213 = vpack.c.b16 %v2029, %v2025
    %v2214 = vpack.c.b16 %v2030, %v2026
    %v2215 = vpack.c.b16 %v2031, %v2027
    %v2216 = vpack.c.b16 %v2036, %v2032
    %v2217 = vpack.c.b16 %v2037, %v2033
    %v2218 = vpack.c.b16 %v2038, %v2034
    %v2219 = vpack.c.b16 %v2039, %v2035
    %v2220 = vpack.c.b16 %v2044, %v2040
    %v2221 = vpack.c.b16 %v2045, %v2041
    %v2222 = vpack.c.b16 %v2046, %v2042
    %v2223 = vpack.c.b16 %v2047, %v2043
    %v2224 = vpack.c.b16 %v2052, %v2048
    %v2225 = vpack.c.b16 %v2053, %v2049
    %v2226 = vpack.c.b16 %v2054, %v2050
    %v2227 = vpack.c.b16 %v2055, %v2051
    %v2228 = vpack.c.b16 %v2060, %v2056
    %v2229 = vpack.c.b16 %v2061, %v2057
    %v2230 = vpack.c.b16 %v2062, %v2058
    %v2231 = vpack.c.b16 %v2063, %v2059
    %v2232 = vpack.c.b16 %v2068, %v2064
    %v2233 = vpack.c.b16 %v2069, %v2065
    %v2234 = vpack.c.b16 %v2070, %v2066
    %v2235 = vpack.c.b16 %v2071, %v2067
    %v2236 = vpack.c.b16 %v2076, %v2072
    %v2237 = vpack.c.b16 %v2077, %v2073
    %v2238 = vpack.c.b16 %v2078, %v2074
    %v2239 = vpack.c.b16 %v2079, %v2075
    %v2240 = vpack.c.b16 %v2084, %v2080
    %v2241 = vpack.c.b16 %v2085, %v2081
    %v2242 = vpack.c.b16 %v2086, %v2082
    %v2243 = vpack.c.b16 %v2087, %v2083
    %v2244 = vpack.c.b16 %v2092, %v2088
    %v2245 = vpack.c.b16 %v2093, %v2089
    %v2246 = vpack.c.b16 %v2094, %v2090
    %v2247 = vpack.c.b16 %v2095, %v2091
    %v2248 = vpack.c.b16 %v2100, %v2096
    %v2249 = vpack.c.b16 %v2101, %v2097
    %v2250 = vpack.c.b16 %v2102, %v2098
    %v2251 = vpack.c.b16 %v2103, %v2099
    %v2252 = vpack.c.b16 %v2108, %v2104
    %v2253 = vpack.c.b16 %v2109, %v2105
    %v2254 = vpack.c.b16 %v2110, %v2106
    %v2255 = vpack.c.b16 %v2111, %v2107
    %v2256 = vpack.c.b16 %v2116, %v2112
    %v2257 = vpack.c.b16 %v2117, %v2113
    %v2258 = vpack.c.b16 %v2118, %v2114
    %v2259 = vpack.c.b16 %v2119, %v2115
    %v2260 = vpack.c.b16 %v2124, %v2120
    %v2261 = vpack.c.b16 %v2125, %v2121
    %v2262 = vpack.c.b16 %v2126, %v2122
    %v2263 = vpack.c.b16 %v2127, %v2123
    %v2264 = vpack.c.b16 %v2132, %v2128
    %v2265 = vpack.c.b16 %v2133, %v2129
    %v2266 = vpack.c.b16 %v2134, %v2130
    %v2267 = vpack.c.b16 %v2135, %v2131
    %v2268 = vpack.c.b16 %v2140, %v2136
    %v2269 = vpack.c.b16 %v2141, %v2137
    %v2270 = vpack.c.b16 %v2142, %v2138
    %v2271 = vpack.c.b16 %v2143, %v2139
    %2400 = vmatpush.bf16.msra.mxu0 %v2172
    %2401 = vmatpush.bf16.msra.mxu0 %v2168
    %2402 = vmatpush.bf16.msra.mxu0 %v2164
    %2403 = vmatpush.bf16.msra.mxu0 %v2160
    %2404 = vmatpush.bf16.msra.mxu0 %v2156
    %2405 = vmatpush.bf16.msra.mxu0 %v2152
    %2406 = vmatpush.bf16.msra.mxu0 %v2148
    %2407 = vmatpush.bf16.msra.mxu0 %v2144
    %2408 = vmatmul.bf16.gmra.mxu0 %v1618
    %v2409 = vpop.f32.mrf.mxu0
    %v2410 = vadd.f32 %v1752, %v2409
    %v2411 = vpop.f32.mrf.mxu0
    %2412 = vdwg.mxu0
    %2413 = vmatpush.bf16.msra.mxu0 %v2204
    %2414 = vmatpush.bf16.msra.mxu0 %v2200
    %2415 = vmatpush.bf16.msra.mxu0 %v2196
    %2416 = vmatpush.bf16.msra.mxu0 %v2192
    %2417 = vmatpush.bf16.msra.mxu0 %v2188
    %2418 = vmatpush.bf16.msra.mxu0 %v2184
    %2419 = vmatpush.bf16.msra.mxu0 %v2180
    %2420 = vmatpush.bf16.msra.mxu0 %v2176
    %2421 = vmatmul.bf16.gmra.mxu0 %v1619
    %v2422 = vpop.f32.mrf.mxu0
    %v2423 = vadd.f32 %v2410, %v2422
    %v2424 = vpop.f32.mrf.mxu0
    %2425 = vdwg.mxu0
    %2426 = vmatpush.bf16.msra.mxu0 %v2236
    %2427 = vmatpush.bf16.msra.mxu0 %v2232
    %2428 = vmatpush.bf16.msra.mxu0 %v2228
    %2429 = vmatpush.bf16.msra.mxu0 %v2224
    %2430 = vmatpush.bf16.msra.mxu0 %v2220
    %2431 = vmatpush.bf16.msra.mxu0 %v2216
    %2432 = vmatpush.bf16.msra.mxu0 %v2212
    %2433 = vmatpush.bf16.msra.mxu0 %v2208
    %2434 = vmatmul.bf16.gmra.mxu0 %v1620
    %v2435 = vpop.f32.mrf.mxu0
    %v2436 = vadd.f32 %v2423, %v2435
    %v2437 = vpop.f32.mrf.mxu0
    %2438 = vdwg.mxu0
    %2439 = vmatpush.bf16.msra.mxu0 %v2268
    %2440 = vmatpush.bf16.msra.mxu0 %v2264
    %2441 = vmatpush.bf16.msra.mxu0 %v2260
    %2442 = vmatpush.bf16.msra.mxu0 %v2256
    %2443 = vmatpush.bf16.msra.mxu0 %v2252
    %2444 = vmatpush.bf16.msra.mxu0 %v2248
    %2445 = vmatpush.bf16.msra.mxu0 %v2244
    %2446 = vmatpush.bf16.msra.mxu0 %v2240
    %2447 = vmatmul.bf16.gmra.mxu0 %v1621
    %v2448 = vpop.f32.mrf.mxu0
    %v2449 = vadd.f32 %v2436, %v2448
    %v2450 = vpop.f32.mrf.mxu0
    %2451 = vdwg.mxu0
    %2452 = vmatpush.bf16.msra.mxu0 %v2173
    %2453 = vmatpush.bf16.msra.mxu0 %v2169
    %2454 = vmatpush.bf16.msra.mxu0 %v2165
    %2455 = vmatpush.bf16.msra.mxu0 %v2161
    %2456 = vmatpush.bf16.msra.mxu0 %v2157
    %2457 = vmatpush.bf16.msra.mxu0 %v2153
    %2458 = vmatpush.bf16.msra.mxu0 %v2149
    %2459 = vmatpush.bf16.msra.mxu0 %v2145
    %2460 = vmatmul.bf16.gmra.mxu0 %v1618
    %v2461 = vpop.f32.mrf.mxu0
    %v2462 = vadd.f32 %v1753, %v2461
    %v2463 = vpop.f32.mrf.mxu0
    %2464 = vdwg.mxu0
    %2465 = vmatpush.bf16.msra.mxu0 %v2205
    %2466 = vmatpush.bf16.msra.mxu0 %v2201
    %2467 = vmatpush.bf16.msra.mxu0 %v2197
    %2468 = vmatpush.bf16.msra.mxu0 %v2193
    %2469 = vmatpush.bf16.msra.mxu0 %v2189
    %2470 = vmatpush.bf16.msra.mxu0 %v2185
    %2471 = vmatpush.bf16.msra.mxu0 %v2181
    %2472 = vmatpush.bf16.msra.mxu0 %v2177
    %2473 = vmatmul.bf16.gmra.mxu0 %v1619
    %v2474 = vpop.f32.mrf.mxu0
    %v2475 = vadd.f32 %v2462, %v2474
    %v2476 = vpop.f32.mrf.mxu0
    %2477 = vdwg.mxu0
    %2478 = vmatpush.bf16.msra.mxu0 %v2237
    %2479 = vmatpush.bf16.msra.mxu0 %v2233
    %2480 = vmatpush.bf16.msra.mxu0 %v2229
    %2481 = vmatpush.bf16.msra.mxu0 %v2225
    %2482 = vmatpush.bf16.msra.mxu0 %v2221
    %2483 = vmatpush.bf16.msra.mxu0 %v2217
    %2484 = vmatpush.bf16.msra.mxu0 %v2213
    %2485 = vmatpush.bf16.msra.mxu0 %v2209
    %2486 = vmatmul.bf16.gmra.mxu0 %v1620
    %v2487 = vpop.f32.mrf.mxu0
    %v2488 = vadd.f32 %v2475, %v2487
    %v2489 = vpop.f32.mrf.mxu0
    %2490 = vdwg.mxu0
    %2491 = vmatpush.bf16.msra.mxu0 %v2269
    %2492 = vmatpush.bf16.msra.mxu0 %v2265
    %2493 = vmatpush.bf16.msra.mxu0 %v2261
    %2494 = vmatpush.bf16.msra.mxu0 %v2257
    %2495 = vmatpush.bf16.msra.mxu0 %v2253
    %2496 = vmatpush.bf16.msra.mxu0 %v2249
    %2497 = vmatpush.bf16.msra.mxu0 %v2245
    %2498 = vmatpush.bf16.msra.mxu0 %v2241
    %2499 = vmatmul.bf16.gmra.mxu0 %v1621
    %v2500 = vpop.f32.mrf.mxu0
    %v2501 = vadd.f32 %v2488, %v2500
    %v2502 = vpop.f32.mrf.mxu0
    %2503 = vdwg.mxu0
    %2504 = vmatpush.bf16.msra.mxu0 %v2174
    %2505 = vmatpush.bf16.msra.mxu0 %v2170
    %2506 = vmatpush.bf16.msra.mxu0 %v2166
    %2507 = vmatpush.bf16.msra.mxu0 %v2162
    %2508 = vmatpush.bf16.msra.mxu0 %v2158
    %2509 = vmatpush.bf16.msra.mxu0 %v2154
    %2510 = vmatpush.bf16.msra.mxu0 %v2150
    %2511 = vmatpush.bf16.msra.mxu0 %v2146
    %2512 = vmatmul.bf16.gmra.mxu0 %v1618
    %v2513 = vpop.f32.mrf.mxu0
    %v2514 = vadd.f32 %v1754, %v2513
    %v2515 = vpop.f32.mrf.mxu0
    %2516 = vdwg.mxu0
    %2517 = vmatpush.bf16.msra.mxu0 %v2206
    %2518 = vmatpush.bf16.msra.mxu0 %v2202
    %2519 = vmatpush.bf16.msra.mxu0 %v2198
    %2520 = vmatpush.bf16.msra.mxu0 %v2194
    %2521 = vmatpush.bf16.msra.mxu0 %v2190
    %2522 = vmatpush.bf16.msra.mxu0 %v2186
    %2523 = vmatpush.bf16.msra.mxu0 %v2182
    %2524 = vmatpush.bf16.msra.mxu0 %v2178
    %2525 = vmatmul.bf16.gmra.mxu0 %v1619
    %v2526 = vpop.f32.mrf.mxu0
    %v2527 = vadd.f32 %v2514, %v2526
    %v2528 = vpop.f32.mrf.mxu0
    %2529 = vdwg.mxu0
    %2530 = vmatpush.bf16.msra.mxu0 %v2238
    %2531 = vmatpush.bf16.msra.mxu0 %v2234
    %2532 = vmatpush.bf16.msra.mxu0 %v2230
    %2533 = vmatpush.bf16.msra.mxu0 %v2226
    %2534 = vmatpush.bf16.msra.mxu0 %v2222
    %2535 = vmatpush.bf16.msra.mxu0 %v2218
    %2536 = vmatpush.bf16.msra.mxu0 %v2214
    %2537 = vmatpush.bf16.msra.mxu0 %v2210
    %2538 = vmatmul.bf16.gmra.mxu0 %v1620
    %v2539 = vpop.f32.mrf.mxu0
    %v2540 = vadd.f32 %v2527, %v2539
    %v2541 = vpop.f32.mrf.mxu0
    %2542 = vdwg.mxu0
    %2543 = vmatpush.bf16.msra.mxu0 %v2270
    %2544 = vmatpush.bf16.msra.mxu0 %v2266
    %2545 = vmatpush.bf16.msra.mxu0 %v2262
    %2546 = vmatpush.bf16.msra.mxu0 %v2258
    %2547 = vmatpush.bf16.msra.mxu0 %v2254
    %2548 = vmatpush.bf16.msra.mxu0 %v2250
    %2549 = vmatpush.bf16.msra.mxu0 %v2246
    %2550 = vmatpush.bf16.msra.mxu0 %v2242
    %2551 = vmatmul.bf16.gmra.mxu0 %v1621
    %v2552 = vpop.f32.mrf.mxu0
    %v2553 = vadd.f32 %v2540, %v2552
    %v2554 = vpop.f32.mrf.mxu0
    %2555 = vdwg.mxu0
    %2556 = vmatpush.bf16.msra.mxu0 %v2175
    %2557 = vmatpush.bf16.msra.mxu0 %v2171
    %2558 = vmatpush.bf16.msra.mxu0 %v2167
    %2559 = vmatpush.bf16.msra.mxu0 %v2163
    %2560 = vmatpush.bf16.msra.mxu0 %v2159
    %2561 = vmatpush.bf16.msra.mxu0 %v2155
    %2562 = vmatpush.bf16.msra.mxu0 %v2151
    %2563 = vmatpush.bf16.msra.mxu0 %v2147
    %2564 = vmatmul.bf16.gmra.mxu0 %v1618
    %v2565 = vpop.f32.mrf.mxu0
    %v2566 = vadd.f32 %v1755, %v2565
    %v2567 = vpop.f32.mrf.mxu0
    %2568 = vdwg.mxu0
    %2569 = vmatpush.bf16.msra.mxu0 %v2207
    %2570 = vmatpush.bf16.msra.mxu0 %v2203
    %2571 = vmatpush.bf16.msra.mxu0 %v2199
    %2572 = vmatpush.bf16.msra.mxu0 %v2195
    %2573 = vmatpush.bf16.msra.mxu0 %v2191
    %2574 = vmatpush.bf16.msra.mxu0 %v2187
    %2575 = vmatpush.bf16.msra.mxu0 %v2183
    %2576 = vmatpush.bf16.msra.mxu0 %v2179
    %2577 = vmatmul.bf16.gmra.mxu0 %v1619
    %v2578 = vpop.f32.mrf.mxu0
    %v2579 = vadd.f32 %v2566, %v2578
    %v2580 = vpop.f32.mrf.mxu0
    %2581 = vdwg.mxu0
    %2582 = vmatpush.bf16.msra.mxu0 %v2239
    %2583 = vmatpush.bf16.msra.mxu0 %v2235
    %2584 = vmatpush.bf16.msra.mxu0 %v2231
    %2585 = vmatpush.bf16.msra.mxu0 %v2227
    %2586 = vmatpush.bf16.msra.mxu0 %v2223
    %2587 = vmatpush.bf16.msra.mxu0 %v2219
    %2588 = vmatpush.bf16.msra.mxu0 %v2215
    %2589 = vmatpush.bf16.msra.mxu0 %v2211
    %2590 = vmatmul.bf16.gmra.mxu0 %v1620
    %v2591 = vpop.f32.mrf.mxu0
    %v2592 = vadd.f32 %v2579, %v2591
    %v2593 = vpop.f32.mrf.mxu0
    %2594 = vdwg.mxu0
    %2595 = vmatpush.bf16.msra.mxu0 %v2271
    %2596 = vmatpush.bf16.msra.mxu0 %v2267
    %2597 = vmatpush.bf16.msra.mxu0 %v2263
    %2598 = vmatpush.bf16.msra.mxu0 %v2259
    %2599 = vmatpush.bf16.msra.mxu0 %v2255
    %2600 = vmatpush.bf16.msra.mxu0 %v2251
    %2601 = vmatpush.bf16.msra.mxu0 %v2247
    %2602 = vmatpush.bf16.msra.mxu0 %v2243
    %2603 = vmatmul.bf16.gmra.mxu0 %v1621
    %v2604 = vpop.f32.mrf.mxu0
    %v2605 = vadd.f32 %v2592, %v2604
    %v2606 = vpop.f32.mrf.mxu0
    %2607 = vdwg.mxu0
    %v2608 = vmax.f32 %v2449, 0.0
    %v2609 = vmax.f32 %v2501, 0.0
    %v2610 = vmax.f32 %v2553, 0.0
    %v2611 = vmax.f32 %v2605, 0.0
    %v2616 = vrot.slane %v2609, 6
    %v2617 = vrot.slane %v2610, 4
    %v2618 = vrot.slane %v2611, 2
    %vm2619 = vcmask 1041408
    %v2620 = vsel %vm2619, %v2608, %v2616
    %vm2621 = vcmask 1045508
    %v2622 = vsel %vm2621, %v2617, %v2618
    %vm2623 = vcmask 1043456
    %v2624 = vsel %vm2623, %v2620, %v2622
    %2626 = vst [vmem:[#allocation13] sm:$0xff] %v2624
    // Predicated region
    $region54: #{tpu_custom_call.1} parent=1 // pred_check
      _
    $region55: #{tpu_custom_call.1} parent=1 // pred_check_branch
      %2628 = sbr.rel (0) target = $region57
    $region56: #{tpu_custom_call.1} parent=1 // pred_region
      %2630 = vsyncadd [#allocation4], 0
      %s2632 = sshll.u32 [#allocation13], 4
      %s2633 = int_to_ptr.vmem [resolvable:$true] %s2632
      %s2634 = sshll.u32 %s7, 4
      %s2635 = int_to_ptr.hbm [resolvable:$true] %s2634
      %2637 = dma.vmem_to_hbm [thread:$0]  %s2633, 128, %s2635, [#allocation4]
    $region57: #{tpu_custom_call.1} parent=1 // pred_fallthru
      _
    // Predicated region
    $region58: #{tpu_custom_call.1} parent=1 // pred_check
      _
    $region59: #{tpu_custom_call.1} parent=1 // pred_check_branch
      %2639 = sbr.rel (0) target = $region61
    $region60: #{tpu_custom_call.1} parent=1 // pred_region
      %2641 = dma.done [#allocation4], 128
    $region61: #{tpu_custom_call.1} parent=1 // pred_fallthru
      _
    %2642 = vsyncpa [#allocation3], 1
    %2643 = vsyncpa [#allocation6], 1
    %2644 = vsyncpa [#allocation9], 1
    %2645 = vsyncpa [#allocation12], 1
    %2646 = vsyncpa [#allocation4], 1

</llo_original>
